<compile_context>
chip_gen: v7x
topology: tpu7x:2x2x1
jax: 0.10.0
libtpu: 0.0.40
codegen_flags: <defaults>
</compile_context>

<pallas_src>
import functools

import numpy as np
import jax
import jax.numpy as jnp
from jax.experimental import pallas as pl
from jax.experimental.pallas import tpu as pltpu


# --------------------------------------------------------------------------
# small helpers
# --------------------------------------------------------------------------

def _row_tile(n, cap=512):
    # Fixed-size row tiles + cdiv grid (Pallas masks the ragged tail); avoids the
    # old exact-divisor fallback that silently degraded to tiny tiles.
    return n if n <= cap else cap


def _gelu_tanh(x):
    # TODO(synk): reference nn.GELU() is exact-erf; tanh form used so the
    # activation can live inside the fused Pallas kernels.
    return 0.5 * x * (1.0 + jnp.tanh(0.7978845608028654 * (x + 0.044715 * x * x * x)))


# --------------------------------------------------------------------------
# dense linear kernels (bf16 MXU operands, f32 accumulation)
# --------------------------------------------------------------------------

def _linear_nobias_kernel(x_ref, w_ref, o_ref):
    y = jnp.dot(x_ref[...], w_ref[...], preferred_element_type=jnp.float32)
    o_ref[...] = y.astype(o_ref.dtype)


def _linear_bias_kernel(x_ref, w_ref, b_ref, o_ref):
    y = jnp.dot(x_ref[...], w_ref[...], preferred_element_type=jnp.float32) + b_ref[...]
    o_ref[...] = y.astype(o_ref.dtype)


def pallas_linear(x, w, b=None, out_dtype=jnp.bfloat16):
    """y = x @ w (+ b).  x: (N, K) cast to bf16 at the producer side."""
    n, kdim = x.shape
    m = w.shape[1]
    t = _row_tile(n)
    x = x.astype(jnp.bfloat16)
    w = w.astype(jnp.bfloat16)
    grid = (pl.cdiv(n, t),)
    if b is None:
        return pl.pallas_call(
            _linear_nobias_kernel,
            out_shape=jax.ShapeDtypeStruct((n, m), out_dtype),
            grid=grid,
            in_specs=[pl.BlockSpec((t, kdim), lambda i: (i, 0)),
                      pl.BlockSpec((kdim, m), lambda i: (0, 0))],
            out_specs=pl.BlockSpec((t, m), lambda i: (i, 0)),
            compiler_params=pltpu.CompilerParams(dimension_semantics=("parallel",)),
        )(x, w)
    b2 = b.reshape(1, m).astype(jnp.float32)
    return pl.pallas_call(
        _linear_bias_kernel,
        out_shape=jax.ShapeDtypeStruct((n, m), out_dtype),
        grid=grid,
        in_specs=[pl.BlockSpec((t, kdim), lambda i: (i, 0)),
                  pl.BlockSpec((kdim, m), lambda i: (0, 0)),
                  pl.BlockSpec((1, m), lambda i: (0, 0))],
        out_specs=pl.BlockSpec((t, m), lambda i: (i, 0)),
        compiler_params=pltpu.CompilerParams(dimension_semantics=("parallel",)),
    )(x, w, b2)


# --------------------------------------------------------------------------
# fused MLP kernels (intermediates stay in VMEM)
# --------------------------------------------------------------------------

def _mlp_gelu_kernel(x_ref, w1_ref, b1_ref, w2_ref, b2_ref, o_ref):
    h = jnp.dot(x_ref[...], w1_ref[...], preferred_element_type=jnp.float32) + b1_ref[...]
    h = _gelu_tanh(h)
    y = jnp.dot(h.astype(jnp.bfloat16), w2_ref[...],
                preferred_element_type=jnp.float32) + b2_ref[...]
    o_ref[...] = y.astype(o_ref.dtype)


def pallas_mlp_gelu(x, w1, b1, w2, b2, out_dtype=jnp.bfloat16):
    """Linear -> GELU -> Linear fused; the (tile, hidden) intermediate never hits HBM."""
    n, d_in = x.shape
    d_hid, d_out = w1.shape[1], w2.shape[1]
    t = _row_tile(n)
    x = x.astype(jnp.bfloat16)
    return pl.pallas_call(
        _mlp_gelu_kernel,
        out_shape=jax.ShapeDtypeStruct((n, d_out), out_dtype),
        grid=(pl.cdiv(n, t),),
        in_specs=[pl.BlockSpec((t, d_in), lambda i: (i, 0)),
                  pl.BlockSpec((d_in, d_hid), lambda i: (0, 0)),
                  pl.BlockSpec((1, d_hid), lambda i: (0, 0)),
                  pl.BlockSpec((d_hid, d_out), lambda i: (0, 0)),
                  pl.BlockSpec((1, d_out), lambda i: (0, 0))],
        out_specs=pl.BlockSpec((t, d_out), lambda i: (i, 0)),
        compiler_params=pltpu.CompilerParams(dimension_semantics=("parallel",)),
    )(x, w1.astype(jnp.bfloat16), b1.reshape(1, d_hid).astype(jnp.float32),
      w2.astype(jnp.bfloat16), b2.reshape(1, d_out).astype(jnp.float32))


def _mlp_geact_kernel(x_ref, w1a_ref, b1a_ref, w1b_ref, b1b_ref, w2_ref, b2_ref, o_ref):
    x = x_ref[...]
    z1 = jnp.dot(x, w1a_ref[...], preferred_element_type=jnp.float32) + b1a_ref[...]
    z2 = jnp.dot(x, w1b_ref[...], preferred_element_type=jnp.float32) + b1b_ref[...]
    h = _gelu_tanh(z1) * z2                           # GeAct gate
    y = jnp.dot(h.astype(jnp.bfloat16), w2_ref[...],
                preferred_element_type=jnp.float32) + b2_ref[...]
    o_ref[...] = y.astype(o_ref.dtype)


def pallas_mlp_geact(x, w1a, b1a, w1b, b1b, w2, b2, out_dtype=jnp.bfloat16):
    n, d_in = x.shape
    d_hid, d_out = w1a.shape[1], w2.shape[1]
    t = _row_tile(n)
    x = x.astype(jnp.bfloat16)
    return pl.pallas_call(
        _mlp_geact_kernel,
        out_shape=jax.ShapeDtypeStruct((n, d_out), out_dtype),
        grid=(pl.cdiv(n, t),),
        in_specs=[pl.BlockSpec((t, d_in), lambda i: (i, 0)),
                  pl.BlockSpec((d_in, d_hid), lambda i: (0, 0)),
                  pl.BlockSpec((1, d_hid), lambda i: (0, 0)),
                  pl.BlockSpec((d_in, d_hid), lambda i: (0, 0)),
                  pl.BlockSpec((1, d_hid), lambda i: (0, 0)),
                  pl.BlockSpec((d_hid, d_out), lambda i: (0, 0)),
                  pl.BlockSpec((1, d_out), lambda i: (0, 0))],
        out_specs=pl.BlockSpec((t, d_out), lambda i: (i, 0)),
        compiler_params=pltpu.CompilerParams(dimension_semantics=("parallel",)),
    )(x, w1a.astype(jnp.bfloat16), b1a.reshape(1, d_hid).astype(jnp.float32),
      w1b.astype(jnp.bfloat16), b1b.reshape(1, d_hid).astype(jnp.float32),
      w2.astype(jnp.bfloat16), b2.reshape(1, d_out).astype(jnp.float32))


# --------------------------------------------------------------------------
# low-rank score kernel (q k^T -> * mod -> leaky_relu -> * post), bf16 epilogue
# --------------------------------------------------------------------------

def _lowrank_kernel(q_ref, k_ref, mod_ref, post_ref, o_ref, *, slope):
    s = jax.lax.dot_general(q_ref[...], k_ref[...],
                            dimension_numbers=(((1,), (1,)), ((), ())),
                            preferred_element_type=jnp.float32)
    # scale is pre-folded into mod at the producer; epilogue in bf16 (perf feedback)
    y = s.astype(jnp.bfloat16) * mod_ref[...]
    y = jnp.where(y >= 0, y, slope * y)               # leaky_relu(0.2), use_softmax=False
    o_ref[...] = (y * post_ref[...]).astype(o_ref.dtype)


def pallas_lowrank_scores(q, k, mod, post, slope=0.2):
    """q: (B,H,Nq,D) bf16, k: (B,H,Ns,D) bf16, mod: (H,Nq,Ns) bf16 (scale folded),
       post: (1,Ns) bf16 applied after leaky_relu -> (B,H,Nq,Ns) bf16."""
    b, h, nq, d = q.shape
    ns = k.shape[2]
    kern = functools.partial(_lowrank_kernel, slope=float(slope))
    # TODO(synk): at production nq~1440 add an nq tile axis so the mod block plus
    # bf16 output stay inside v7x's 64 MiB VMEM.
    return pl.pallas_call(
        kern,
        out_shape=jax.ShapeDtypeStruct((b, h, nq, ns), jnp.bfloat16),
        grid=(h, b),        # batch innermost: (Nq,Ns) mod block DMA reused across b
        in_specs=[
            pl.BlockSpec((None, None, nq, d), lambda hi, bi: (bi, hi, 0, 0)),
            pl.BlockSpec((None, None, ns, d), lambda hi, bi: (bi, hi, 0, 0)),
            pl.BlockSpec((None, nq, ns), lambda hi, bi: (hi, 0, 0)),
            pl.BlockSpec((1, ns), lambda hi, bi: (0, 0)),
        ],
        out_specs=pl.BlockSpec((None, None, nq, ns), lambda hi, bi: (bi, hi, 0, 0)),
        compiler_params=pltpu.CompilerParams(
            dimension_semantics=("parallel", "parallel")),
    )(q, k, mod, post)


# --------------------------------------------------------------------------
# fused factorized attention + per-head GroupNorm + merge Linear
# --------------------------------------------------------------------------

def _fact_attn_merge_kernel(klat_ref, klong_ref, v_ref, wgT_ref, o_ref, y_ref, *, eps):
    """Per (batch, head) grid step:
         t[c,i,m] = sum_j k_lat_eff[i,j] v[c,m,j]      (batched MXU dot, contract last dims)
         x[c,i,l] = sum_m t[c,i,m]  k_long_eff[l,m]    (batched MXU dot, contract last dims)
         per-head GroupNorm stats over c (vectorized), normalized values staged in
         the cross-head VMEM scratch y_ref[(i, h*c+ch, l)].
       At the last head: ONE merge matmul with contraction depth heads*dim_head and
       a single full-block output store (layout (i, dim_out, l); fixed in XLA outside).
       gamma is folded into the merge weight, beta into a bias added outside.
       TODO(synk): tile n_lat_q / n_lon_s here for production S2 grids (v7x VMEM)."""
    hi = pl.program_id(1)
    c, n_lon_s, n_lat_s = v_ref.shape
    n_lat_q = klat_ref.shape[0]
    n_lon_q = klong_ref.shape[0]

    klat_b = jnp.broadcast_to(klat_ref[...][None], (c, n_lat_q, n_lat_s))
    t = jax.lax.dot_general(klat_b, v_ref[...],
                            dimension_numbers=(((2,), (2,)), ((0,), (0,))),
                            preferred_element_type=jnp.float32)      # (c, n_lat_q, n_lon_s)

    klong_b = jnp.broadcast_to(klong_ref[...][None], (c, n_lon_q, n_lon_s))
    x = jax.lax.dot_general(t.astype(jnp.bfloat16), klong_b,
                            dimension_numbers=(((2,), (2,)), ((0,), (0,))),
                            preferred_element_type=jnp.float32)      # (c, n_lat_q, n_lon_q)

    # GroupNorm(group == head) statistics: biased variance, centered two-pass form
    mean = jnp.mean(x, axis=0)                                       # (n_lat_q, n_lon_q)
    var = jnp.mean((x - mean) ** 2, axis=0)
    rstd = jax.lax.rsqrt(var + eps)

    # stage normalized activations for this head into the cross-head scratch
    base = pl.multiple_of(hi * c, c)
    for ch in range(c):          # dim_head iterations: elementwise + store only
        y_ref[:, base + ch, :] = ((x[ch] - mean) * rstd).astype(y_ref.dtype)

    @pl.when(hi == pl.num_programs(1) - 1)
    def _merge():
        yv = y_ref[...]                                              # (I, heads*c, L) bf16
        n_i, k_dim, n_l = yv.shape
        n_o = wgT_ref.shape[0]
        wgT_b = jnp.broadcast_to(wgT_ref[...][None], (n_i, n_o, k_dim))
        out = jax.lax.dot_general(wgT_b, yv,
                                  dimension_numbers=(((2,), (1,)), ((0,), (0,))),
                                  preferred_element_type=jnp.float32)  # (I, O, L)
        o_ref[...] = out.astype(o_ref.dtype)


def pallas_fact_attn_merge(k_lat_eff, k_long_eff, v5, w_merge_g, eps=1e-5):
    """k_lat_eff: (B,H,NlatQ,NlatS) bf16 (weights_lat & pi/n_lat folded),
       k_long_eff: (B,H,NlonQ,NlonS) bf16 (2pi/n_lon folded),
       v5: (B,H,C,NlonS,NlatS) bf16, w_merge_g: (H*C, dim_out) (gamma folded)
       -> (B, NlatQ, NlonQ, dim_out) f32 (beta-bias added by the caller)."""
    b, heads, n_lat_q, n_lat_s = k_lat_eff.shape
    n_lon_q, n_lon_s = k_long_eff.shape[2], k_long_eff.shape[3]
    c = v5.shape[2]
    dim_out = w_merge_g.shape[-1]
    k_dim = heads * c

    wgT = jnp.transpose(w_merge_g).astype(jnp.bfloat16)              # (dim_out, heads*c)
    kern = functools.partial(_fact_attn_merge_kernel, eps=float(eps))
    # TODO(synk): GroupNorm eps of the custom class not given; 1e-5 assumed.

    out = pl.pallas_call(
        kern,
        out_shape=jax.ShapeDtypeStruct((b, n_lat_q, dim_out, n_lon_q), jnp.float32),
        grid=(b, heads),   # batch parallel (>=2 keeps both v7x cores busy), heads staged
        in_specs=[
            pl.BlockSpec((None, None, n_lat_q, n_lat_s), lambda bi, hi: (bi, hi, 0, 0)),
            pl.BlockSpec((None, None, n_lon_q, n_lon_s), lambda bi, hi: (bi, hi, 0, 0)),
            pl.BlockSpec((None, None, c, n_lon_s, n_lat_s),
                         lambda bi, hi: (bi, hi, 0, 0, 0)),
            pl.BlockSpec((dim_out, k_dim), lambda bi, hi: (0, 0)),
        ],
        out_specs=pl.BlockSpec((None, n_lat_q, dim_out, n_lon_q),
                               lambda bi, hi: (bi, 0, 0, 0)),
        scratch_shapes=[pltpu.VMEM((n_lat_q, k_dim, n_lon_q), jnp.bfloat16)],
        compiler_params=pltpu.CompilerParams(
            dimension_semantics=("parallel", "arbitrary"),
            vmem_limit_bytes=48 * 1024 * 1024),
    )(k_lat_eff, k_long_eff, v5, wgT)
    return jnp.transpose(out, (0, 1, 3, 2))                          # (b, I, L, O)


# --------------------------------------------------------------------------
# Plain-JAX glue (elementwise / small ops / parameter plumbing)
# --------------------------------------------------------------------------

def layer_norm(x, g, b, eps=1e-5):
    x = x.astype(jnp.float32)
    mu = x.mean(-1, keepdims=True)
    var = ((x - mu) ** 2).mean(-1, keepdims=True)
    return (x - mu) * jax.lax.rsqrt(var + eps) * g + b


def group_norm_cl(x, num_groups, gamma, beta, eps=1e-5):
    # TODO(synk): custom channels-last GroupNorm internals not provided; per-location
    # normalization over each channel group, biased variance assumed.
    c = x.shape[-1]
    gs = c // num_groups
    xg = x.reshape(x.shape[:-1] + (num_groups, gs)).astype(jnp.float32)
    mu = xg.mean(-1, keepdims=True)
    var = ((xg - mu) ** 2).mean(-1, keepdims=True)
    xn = ((xg - mu) * jax.lax.rsqrt(var + eps)).reshape(x.shape)
    return xn * gamma + beta


def radial_bessel_decay(dist, head_w, cutoff, periodic):
    # TODO(synk): RadialBesselBasis source not provided; approximated as a
    # spherical-Bessel (sinc) basis with per-head sigmoid mixing weights.
    if periodic:
        dist = jnp.minimum(dist, cutoff - dist)
    num_k = head_w.shape[0]
    order = jnp.arange(1, num_k + 1, dtype=jnp.float32)
    d = jnp.clip(dist / cutoff, 1e-4, None)
    basis = jnp.sqrt(2.0 / cutoff) * jnp.sin(order[None, None, :] * jnp.pi *
                                             d[..., None]) / d[..., None]
    return jax.nn.sigmoid(jnp.einsum('ijk,kh->hij', basis, head_w))   # (heads, n_qry, n_src)


def get_latitude_weights(lat, polar_eps=1.0):
    w = jnp.cos(lat)
    dlat = lat[1] - lat[0]
    polar_w = jnp.sin(dlat / 4.0) ** 2 / jnp.sin(dlat / 2.0)
    w = w.at[0].set(jnp.where(w[0] < 1e-3, polar_eps * polar_w, w[0]))
    w = w.at[-1].set(jnp.where(w[-1] < 1e-3, polar_eps * polar_w, w[-1]))
    return w.astype(jnp.float32)


def pooling_reducer(x, p, mesh_weights=None):
    """PoolingReducer: Linear(no bias) -> optional mesh weighting over dim 1 ->
       mean over dim 2 -> PreNorm(LayerNorm) -> fused GeAct MLP kernel."""
    b, n, m, cin = x.shape
    hid = p['w_in'].shape[1]
    h = pallas_linear(x.reshape(-1, cin), p['w_in']).reshape(b, n, m, hid)
    h = h.astype(jnp.float32)
    if mesh_weights is not None:
        h = h * mesh_weights[None, :, None, None]
    h = h.mean(axis=2)                                               # (b, n, hid)
    hn = layer_norm(h, p['ln_g'], p['ln_b'])
    z = pallas_mlp_geact(hn.reshape(-1, hid), p['w1a'], p['b1a'], p['w1b'], p['b1b'],
                         p['w2'], p['b2'])
    return z.reshape(b, n, -1)                                       # bf16


def siren_net(x, p):
    # TODO(synk): SirenNet source not provided; lucidrains-style SIREN assumed
    # (num_layers sine layers, w0=30 for the first, then a linear output layer).
    h = x
    for i, (w, bb) in enumerate(p['hidden']):
        w0 = p['w0_initial'] if i == 0 else p['w0']
        h = jnp.sin(w0 * (h @ w + bb))
    w, bb = p['final']
    return h @ w + bb


def low_rank_scores_cross(q_basis, u_src_pooled, w_k, mod_scaled, post, heads, dk):
    """LowRankKernel with project_qry=False; modulation multiply (scale folded),
       leaky_relu(0.2) and the post-scale all fused in the Pallas kernel."""
    b, n_q, _ = q_basis.shape
    n_s, latent = u_src_pooled.shape[1], u_src_pooled.shape[2]
    # TODO(synk): head-split convention of the query basis assumed as '(h d)'.
    q = q_basis.reshape(b, n_q, heads, dk).transpose(0, 2, 1, 3).astype(jnp.bfloat16)
    k = pallas_linear(u_src_pooled.reshape(-1, latent), w_k, out_dtype=jnp.bfloat16)
    k = k.reshape(b, n_s, heads, dk).transpose(0, 2, 1, 3)
    return pallas_lowrank_scores(q, k, mod_scaled.astype(jnp.bfloat16),
                                 post.astype(jnp.bfloat16), slope=0.2)


# --------------------------------------------------------------------------
# FCABlockS2 / CABlock forward
# --------------------------------------------------------------------------

def fcablock_s2_forward(p, u_src, query_basis_lst, query_pos_lst, src_pos_lst, cfg):
    b, n_lat_s, n_lon_s, dim = u_src.shape
    heads, dim_head = cfg['heads'], cfg['dim_head']
    km = cfg['kernel_multiplier']
    dk = dim_head * km
    hd = heads * dim_head
    use_softmax = cfg.get('use_softmax', False)
    scaling = (1.0 / np.sqrt(dk)) if (km > 4 or use_softmax) else cfg['scaling_factor']

    src_lat, src_long = src_pos_lst
    qry_lat, qry_long = query_pos_lst
    u_lat_qry, u_long_qry = query_basis_lst

    # channel mixer: GroupNorm(32, dim) + fused MLP([dim, 4*dim, hd + dim], GELU)
    x = group_norm_cl(u_src, 32, p['cm_gn_g'], p['cm_gn_b']).astype(jnp.bfloat16)
    mixed = pallas_mlp_gelu(x.reshape(-1, dim), p['cm_w1'], p['cm_b1'],
                            p['cm_w2'], p['cm_b2'])
    mixed = mixed.reshape(b, n_lat_s, n_lon_s, hd + dim)
    v_src = mixed[..., :hd]                                          # bf16
    u_mid = mixed[..., hd:]                                          # bf16

    weights_lat = get_latitude_weights(src_lat, cfg['polar_eps'])    # (n_lat_s,)

    # pooling reducers over the source grid
    u_long_src = pooling_reducer(jnp.transpose(u_mid, (0, 2, 1, 3)), p['to_long'])
    u_lat_src = pooling_reducer(u_mid, p['to_lat'], mesh_weights=weights_lat)

    # positional (Bessel) decay modulations between query and source positions
    long_dist = jnp.abs(src_long[None, :] - qry_long[:, None])
    lat_dist = jnp.abs(src_lat[None, :] - qry_lat[:, None])
    long_decay = radial_bessel_decay(long_dist, p['pe_long_w'], 2.0 * np.pi, periodic=True)
    lat_decay = radial_bessel_decay(lat_dist, p['pe_lat_w'], np.pi, periodic=False)

    # attention-side quadrature weights and scales hoisted into the low-rank epilogue
    post_long = jnp.full((1, n_lon_s), 2.0 * np.pi / n_lon_s, jnp.float32)
    post_lat = (weights_lat * (np.pi / n_lat_s)).reshape(1, n_lat_s)

    k_long = low_rank_scores_cross(u_long_qry, u_long_src, p['lrk_long_wk'],
                                   long_decay * scaling, post_long, heads, dk)
    k_lat = low_rank_scores_cross(u_lat_qry, u_lat_src, p['lrk_lat_wk'],
                                  lat_decay * scaling, post_lat, heads, dk)

    # value field per (batch, head): (b, h, c, n_lon_s, n_lat_s) in bf16
    # TODO(synk): this XLA relayout could be removed by emitting this layout
    # directly from the channel-mixer kernel (perf feedback item 5).
    v5 = v_src.reshape(b, n_lat_s, n_lon_s, heads, dim_head)
    v5 = jnp.transpose(v5, (0, 3, 4, 2, 1))

    # merge_head: GroupNorm(heads, hd) affine folded into the merge Linear
    wg = p['merge_w'] * p['gn_gamma'][:, None]                       # (hd, dim_out)
    bsum = p['gn_beta'] @ p['merge_w']                               # (dim_out,)

    out = pallas_fact_attn_merge(k_lat, k_long, v5, wg)
    return out + bsum[None, None, None, :]                           # (b, nlatQ, nlonQ, dim_out)


def cablock_forward(params, src, qry_pos_lst, src_pos_lst, cfg):
    b = src.shape[0]
    qry_lat, qry_long = qry_pos_lst
    qry_y = (qry_lat + np.pi / 2.0) / np.pi - 0.5
    qry_x = qry_long / (2.0 * np.pi) - 0.5
    q1 = siren_net(qry_y[:, None], params['siren_lat'])     # (n_lat_q, heads*dk)
    q2 = siren_net(qry_x[:, None], params['siren_long'])    # (n_lon_q, heads*dk)
    q1 = jnp.broadcast_to(q1[None], (b,) + q1.shape)
    q2 = jnp.broadcast_to(q2[None], (b,) + q2.shape)
    return fcablock_s2_forward(params['attn'], src, (q1, q2),
                               qry_pos_lst, src_pos_lst, cfg)


# --------------------------------------------------------------------------
# Parameter init (deterministic, torch-Linear-like uniform)
# --------------------------------------------------------------------------

def _uniform(key, shape, fan_in):
    bound = 1.0 / np.sqrt(fan_in)
    return jax.random.uniform(key, shape, jnp.float32, -bound, bound)


def init_siren(key, dim_in, dim_hidden, dim_out, num_layers, w0=1.0, w0_initial=30.0):
    keys = jax.random.split(key, 2 * (num_layers + 1))
    hidden = []
    d_in = dim_in
    for i in range(num_layers):
        w_std = (1.0 / d_in) if i == 0 else (np.sqrt(6.0 / d_in) / w0)
        w = jax.random.uniform(keys[2 * i], (d_in, dim_hidden), jnp.float32, -w_std, w_std)
        bb = jax.random.uniform(keys[2 * i + 1], (dim_hidden,), jnp.float32, -w_std, w_std)
        hidden.append((w, bb))
        d_in = dim_hidden
    w_std = np.sqrt(6.0 / d_in) / w0
    w = jax.random.uniform(keys[-2], (d_in, dim_out), jnp.float32, -w_std, w_std)
    bb = jax.random.uniform(keys[-1], (dim_out,), jnp.float32, -w_std, w_std)
    return {'hidden': hidden, 'final': (w, bb), 'w0': w0, 'w0_initial': w0_initial}


def init_params(key, cfg):
    dim, heads, dim_head = cfg['dim'], cfg['heads'], cfg['dim_head']
    latent, dim_out, km = cfg['latent_dim'], cfg['dim_out'], cfg['kernel_multiplier']
    dk = dim_head * km
    hd = heads * dim_head
    keys = iter(jax.random.split(key, 64))
    p = {}
    p['siren_lat'] = init_siren(next(keys), 1, dim * 2, hd * km, 4)
    p['siren_long'] = init_siren(next(keys), 1, dim * 2, hd * km, 4)

    a = {}
    a['cm_gn_g'] = jnp.ones((dim,), jnp.float32)
    a['cm_gn_b'] = jnp.zeros((dim,), jnp.float32)
    a['cm_w1'] = _uniform(next(keys), (dim, 4 * dim), dim)
    a['cm_b1'] = _uniform(next(keys), (4 * dim,), dim)
    a['cm_w2'] = _uniform(next(keys), (4 * dim, hd + dim), 4 * dim)
    a['cm_b2'] = _uniform(next(keys), (hd + dim,), 4 * dim)

    def pooling():
        return {
            'w_in': _uniform(next(keys), (dim, dim), dim),
            'ln_g': jnp.ones((dim,), jnp.float32),
            'ln_b': jnp.zeros((dim,), jnp.float32),
            'w1a': _uniform(next(keys), (dim, dim), dim),   # GeAct: two half projections
            'b1a': _uniform(next(keys), (dim,), dim),
            'w1b': _uniform(next(keys), (dim, dim), dim),
            'b1b': _uniform(next(keys), (dim,), dim),
            'w2': _uniform(next(keys), (dim, latent), dim),
            'b2': _uniform(next(keys), (latent,), dim),
        }

    a['to_long'] = pooling()
    a['to_lat'] = pooling()
    a['lrk_long_wk'] = _uniform(next(keys), (latent, heads * dk), latent)
    a['lrk_lat_wk'] = _uniform(next(keys), (latent, heads * dk), latent)
    a['pe_long_w'] = 0.1 * jax.random.normal(next(keys), (64, heads), jnp.float32)
    a['pe_lat_w'] = 0.1 * jax.random.normal(next(keys), (32, heads), jnp.float32)
    a['gn_gamma'] = jnp.ones((hd,), jnp.float32)
    a['gn_beta'] = jnp.zeros((hd,), jnp.float32)
    a['merge_w'] = _uniform(next(keys), (hd, dim_out), hd)
    p['attn'] = a
    return p


# --------------------------------------------------------------------------

if __name__ == "__main__":
    # dims chosen so hot linear/merge outputs (128/256 lanes) are lane-dense
    cfg = dict(dim=64, dim_head=8, latent_dim=64, heads=8, dim_out=128,
               kernel_multiplier=2, scaling_factor=1.0, polar_eps=1.0,
               use_softmax=False)
    b, n_lat, n_lon = 2, 8, 16

    key = jax.random.PRNGKey(0)
    k_params, k_u = jax.random.split(key)
    params = init_params(k_params, cfg)

    src = jax.random.normal(k_u, (b, n_lat, n_lon, cfg['dim']), jnp.float32)
    lat = jnp.linspace(-np.pi / 2, np.pi / 2, n_lat).astype(jnp.float32)
    long = jnp.linspace(0.0, 2.0 * np.pi, n_lon, endpoint=False).astype(jnp.float32)

    # query grid == source grid for the demo
    out = cablock_forward(params, src, (lat, long), (lat, long), cfg)
    out = jax.block_until_ready(out)

    assert out.shape == (b, n_lat, n_lon, cfg['dim_out']), out.shape
    assert bool(jnp.all(jnp.isfinite(out)))
    print("KERNEL_OK")
</pallas_src>

<mosaic_0001>
module attributes {stable_mosaic.version = 11 : i64} {
  func.func @_mlp_gelu_kernel(%arg0: i32, %arg1: memref<256x64xbf16, #tpu.memory_space<vmem>>, %arg2: memref<64x256xbf16, #tpu.memory_space<vmem>>, %arg3: memref<1x256xf32, #tpu.memory_space<vmem>>, %arg4: memref<256x128xbf16, #tpu.memory_space<vmem>>, %arg5: memref<1x128xf32, #tpu.memory_space<vmem>>, %arg6: memref<256x128xbf16, #tpu.memory_space<vmem>>) attributes {dimension_semantics = [#tpu.dimension_semantics<parallel>], iteration_bounds = array<i64: 1>, scalar_prefetch = 0 : i64, scratch_operands = 0 : i64, tpu.core_type = #tpu.core_type<tc>, window_params = [{transform_indices = @transform_0, window_bounds = array<i64: 256, 64>}, {pipeline_mode = #tpu.pipeline_mode<synchronous>, transform_indices = @transform_1, window_bounds = array<i64: 64, 256>}, {pipeline_mode = #tpu.pipeline_mode<synchronous>, transform_indices = @transform_2, window_bounds = array<i64: 1, 256>}, {pipeline_mode = #tpu.pipeline_mode<synchronous>, transform_indices = @transform_3, window_bounds = array<i64: 256, 128>}, {pipeline_mode = #tpu.pipeline_mode<synchronous>, transform_indices = @transform_4, window_bounds = array<i64: 1, 128>}, {transform_indices = @transform_5, window_bounds = array<i64: 256, 128>}]} {
    %c0 = arith.constant 0 : index
    %c0_0 = arith.constant 0 : index
    %0 = vector.load %arg1[%c0, %c0_0] : memref<256x64xbf16, #tpu.memory_space<vmem>>, vector<256x64xbf16>
    %c0_1 = arith.constant 0 : index
    %c0_2 = arith.constant 0 : index
    %1 = vector.load %arg2[%c0_1, %c0_2] : memref<64x256xbf16, #tpu.memory_space<vmem>>, vector<64x256xbf16>
    %cst = arith.constant dense<0.000000e+00> : vector<256x256xf32>
    %2 = tpu.matmul %0, %1, %cst {dimension_numbers = #tpu.dot_dimension_numbers<[1], [0], [0], [1], [0, 0, 1, 1], [], []>} : vector<256x64xbf16>, vector<64x256xbf16>, vector<256x256xf32> -> vector<256x256xf32>
    %c0_3 = arith.constant 0 : index
    %c0_4 = arith.constant 0 : index
    %3 = vector.load %arg3[%c0_3, %c0_4] : memref<1x256xf32, #tpu.memory_space<vmem>>, vector<1x256xf32>
    %4 = vector.broadcast %3 : vector<1x256xf32> to vector<256x256xf32>
    %5 = arith.addf %2, %4 : vector<256x256xf32>
    %cst_5 = arith.constant 5.000000e-01 : f32
    %6 = vector.broadcast %cst_5 : f32 to vector<256x256xf32>
    %7 = arith.mulf %6, %5 : vector<256x256xf32>
    %cst_6 = arith.constant 4.471500e-02 : f32
    %8 = vector.broadcast %cst_6 : f32 to vector<256x256xf32>
    %9 = arith.mulf %8, %5 : vector<256x256xf32>
    %10 = arith.mulf %9, %5 : vector<256x256xf32>
    %11 = arith.mulf %10, %5 : vector<256x256xf32>
    %12 = arith.addf %5, %11 : vector<256x256xf32>
    %cst_7 = arith.constant 0.797884583 : f32
    %13 = vector.broadcast %cst_7 : f32 to vector<256x256xf32>
    %14 = arith.mulf %13, %12 : vector<256x256xf32>
    %15 = math.tanh %14 : vector<256x256xf32>
    %cst_8 = arith.constant 1.000000e+00 : f32
    %16 = vector.broadcast %cst_8 : f32 to vector<256x256xf32>
    %17 = arith.addf %16, %15 : vector<256x256xf32>
    %18 = arith.mulf %7, %17 : vector<256x256xf32>
    %19 = arith.truncf %18 : vector<256x256xf32> to vector<256x256xbf16>
    %c0_9 = arith.constant 0 : index
    %c0_10 = arith.constant 0 : index
    %20 = vector.load %arg4[%c0_9, %c0_10] : memref<256x128xbf16, #tpu.memory_space<vmem>>, vector<256x128xbf16>
    %cst_11 = arith.constant dense<0.000000e+00> : vector<256x128xf32>
    %21 = tpu.matmul %19, %20, %cst_11 {dimension_numbers = #tpu.dot_dimension_numbers<[1], [0], [0], [1], [0, 0, 1, 1], [], []>} : vector<256x256xbf16>, vector<256x128xbf16>, vector<256x128xf32> -> vector<256x128xf32>
    %c0_12 = arith.constant 0 : index
    %c0_13 = arith.constant 0 : index
    %22 = vector.load %arg5[%c0_12, %c0_13] : memref<1x128xf32, #tpu.memory_space<vmem>>, vector<1x128xf32>
    %23 = vector.broadcast %22 : vector<1x128xf32> to vector<256x128xf32>
    %24 = arith.addf %21, %23 : vector<256x128xf32>
    %25 = arith.truncf %24 : vector<256x128xf32> to vector<256x128xbf16>
    %c0_14 = arith.constant 0 : index
    %c0_15 = arith.constant 0 : index
    %26 = vector.load %arg6[%c0_14, %c0_15] : memref<256x128xbf16, #tpu.memory_space<vmem>>, vector<256x128xbf16>
    tpu.vector_store %arg6[%c0_14, %c0_15], %25 {strides = array<i32>} : memref<256x128xbf16, #tpu.memory_space<vmem>>, vector<256x128xbf16>,
    return
  }
  func.func @transform_0(%arg0: i32) -> (i32, i32) {
    %c0_i32 = arith.constant 0 : i32
    %c0_i32_0 = arith.constant 0 : i32
    return %arg0, %c0_i32 : i32, i32
  }
  func.func @transform_1(%arg0: i32) -> (i32, i32) {
    %c0_i32 = arith.constant 0 : i32
    %c0_i32_0 = arith.constant 0 : i32
    %c0_i32_1 = arith.constant 0 : i32
    return %c0_i32, %c0_i32_0 : i32, i32
  }
  func.func @transform_2(%arg0: i32) -> (i32, i32) {
    %c0_i32 = arith.constant 0 : i32
    %c0_i32_0 = arith.constant 0 : i32
    %c0_i32_1 = arith.constant 0 : i32
    return %c0_i32, %c0_i32_0 : i32, i32
  }
  func.func @transform_3(%arg0: i32) -> (i32, i32) {
    %c0_i32 = arith.constant 0 : i32
    %c0_i32_0 = arith.constant 0 : i32
    %c0_i32_1 = arith.constant 0 : i32
    return %c0_i32, %c0_i32_0 : i32, i32
  }
  func.func @transform_4(%arg0: i32) -> (i32, i32) {
    %c0_i32 = arith.constant 0 : i32
    %c0_i32_0 = arith.constant 0 : i32
    %c0_i32_1 = arith.constant 0 : i32
    return %c0_i32, %c0_i32_0 : i32, i32
  }
  func.func @transform_5(%arg0: i32) -> (i32, i32) {
    %c0_i32 = arith.constant 0 : i32
    %c0_i32_0 = arith.constant 0 : i32
    return %arg0, %c0_i32 : i32, i32
  }
}

</mosaic_0001>

<llo_original>
// kernel: tpu_custom_call.1
$region0: #{tpu_custom_call.1}
  #allocation0 [shape = 'u32[]', space=smem, size = 0x4, offset = 0x4, fixed_abs, tag = 'smem constant byte address 0x4 - core index']
  #allocation1 [shape = 'u32[144,128]{1,0:T(1,128)}', space=vmem, size = 0x12000, scoped, tag = 'internal scratch']
  %s0 = inlined_call_operand.vmem [shape: bf16[256,64], index: 0, kind: input, shape index: {}]
  %s1 = inlined_call_operand.vmem [shape: bf16[64,256], index: 1, kind: input, shape index: {}]
  %s2 = inlined_call_operand.vmem [shape: f32[1,256], index: 2, kind: input, shape index: {}]
  %s3 = inlined_call_operand.vmem [shape: bf16[256,128], index: 3, kind: input, shape index: {}]
  %s4 = inlined_call_operand.vmem [shape: f32[1,128], index: 4, kind: input, shape index: {}]
  %s5 = inlined_call_operand.hbm [shape: bf16[256,128], index: 5, kind: output, shape index: {}]
  %s6 = sld [smem:[#allocation0]]
  $region30: #{tpu_custom_call.1} parent=0
    _
  %s8 = ssub.s32 1, %s6
  %s9 = scalar_select 0, %s8, %s6
  $region1: #{tpu_custom_call.1} parent=0
    #allocation2 [shape = 'u8[65536]{0}', space=vmem, size = 0x10000, scoped, tag = 'output window, operand 0, single buffered']
    #allocation3 [shape = 's32[1]{0}', space=sflag, size = 0x4, scoped, tag = 'scoped memory for tpu_custom_call.1']
    %10 = vsyncpa [#allocation3], 0
    // Predicated region
    $region2: #{tpu_custom_call.1} parent=1 // pred_check
      _
    $region3: #{tpu_custom_call.1} parent=1 // pred_check_branch
      %12 = sbr.rel (0) target = $region5
    $region4: #{tpu_custom_call.1} parent=1 // pred_region
      _
    $region5: #{tpu_custom_call.1} parent=1 // pred_fallthru
      _
    // Predicated region
    $region6: #{tpu_custom_call.1} parent=1 // pred_check
      _
    $region7: #{tpu_custom_call.1} parent=1 // pred_check_branch
      %14 = sbr.rel (0) target = $region9
    $region8: #{tpu_custom_call.1} parent=1 // pred_region
      _
    $region9: #{tpu_custom_call.1} parent=1 // pred_fallthru
      _
    // Predicated region
    $region10: #{tpu_custom_call.1} parent=1 // pred_check
      _
    $region11: #{tpu_custom_call.1} parent=1 // pred_check_branch
      %16 = sbr.rel (0) target = $region13
    $region12: #{tpu_custom_call.1} parent=1 // pred_region
      _
    $region13: #{tpu_custom_call.1} parent=1 // pred_fallthru
      _
    // Predicated region
    $region14: #{tpu_custom_call.1} parent=1 // pred_check
      _
    $region15: #{tpu_custom_call.1} parent=1 // pred_check_branch
      %18 = sbr.rel (0) target = $region17
    $region16: #{tpu_custom_call.1} parent=1 // pred_region
      _
    $region17: #{tpu_custom_call.1} parent=1 // pred_fallthru
      _
    // Predicated region
    $region18: #{tpu_custom_call.1} parent=1 // pred_check
      _
    $region19: #{tpu_custom_call.1} parent=1 // pred_check_branch
      %20 = sbr.rel (0) target = $region21
    $region20: #{tpu_custom_call.1} parent=1 // pred_region
      _
    $region21: #{tpu_custom_call.1} parent=1 // pred_fallthru
      _
    %v22 = vld [vmem:[%s0] sm:$0xf]
    %v23 = vld [vmem:[%s0 + $0x4] sm:$0xf]
    %v24 = vld [vmem:[%s0 + $0x8] sm:$0xf]
    %v25 = vld [vmem:[%s0 + $0xc] sm:$0xf]
    %v26 = vld [vmem:[%s0 + $0x10] sm:$0xf]
    %v27 = vld [vmem:[%s0 + $0x14] sm:$0xf]
    %v28 = vld [vmem:[%s0 + $0x18] sm:$0xf]
    %v29 = vld [vmem:[%s0 + $0x1c] sm:$0xf]
    %v30 = vld [vmem:[%s0 + $0x20] sm:$0xf]
    %v31 = vld [vmem:[%s0 + $0x24] sm:$0xf]
    %v32 = vld [vmem:[%s0 + $0x28] sm:$0xf]
    %v33 = vld [vmem:[%s0 + $0x2c] sm:$0xf]
    %v34 = vld [vmem:[%s0 + $0x30] sm:$0xf]
    %v35 = vld [vmem:[%s0 + $0x34] sm:$0xf]
    %v36 = vld [vmem:[%s0 + $0x38] sm:$0xf]
    %v37 = vld [vmem:[%s0 + $0x3c] sm:$0xf]
    %v38 = vld [vmem:[%s0 + $0x40] sm:$0xf]
    %v39 = vld [vmem:[%s0 + $0x44] sm:$0xf]
    %v40 = vld [vmem:[%s0 + $0x48] sm:$0xf]
    %v41 = vld [vmem:[%s0 + $0x4c] sm:$0xf]
    %v42 = vld [vmem:[%s0 + $0x50] sm:$0xf]
    %v43 = vld [vmem:[%s0 + $0x54] sm:$0xf]
    %v44 = vld [vmem:[%s0 + $0x58] sm:$0xf]
    %v45 = vld [vmem:[%s0 + $0x5c] sm:$0xf]
    %v46 = vld [vmem:[%s0 + $0x60] sm:$0xf]
    %v47 = vld [vmem:[%s0 + $0x64] sm:$0xf]
    %v48 = vld [vmem:[%s0 + $0x68] sm:$0xf]
    %v49 = vld [vmem:[%s0 + $0x6c] sm:$0xf]
    %v50 = vld [vmem:[%s0 + $0x70] sm:$0xf]
    %v51 = vld [vmem:[%s0 + $0x74] sm:$0xf]
    %v52 = vld [vmem:[%s0 + $0x78] sm:$0xf]
    %v53 = vld [vmem:[%s0 + $0x7c] sm:$0xf]
    %v54 = vld [vmem:[%s1] sm:$0xff]
    %v55 = vld [vmem:[%s1 + $0x8] sm:$0xff]
    %v56 = vld [vmem:[%s1 + $0x10] sm:$0xff]
    %v57 = vld [vmem:[%s1 + $0x18] sm:$0xff]
    %v58 = vld [vmem:[%s1 + $0x20] sm:$0xff]
    %v59 = vld [vmem:[%s1 + $0x28] sm:$0xff]
    %v60 = vld [vmem:[%s1 + $0x30] sm:$0xff]
    %v61 = vld [vmem:[%s1 + $0x38] sm:$0xff]
    %v62 = vld [vmem:[%s2] sm:$0x3]
    %v64 = vlaneseq
    %v65 = vshrl.u32 %v64, 7
    %v66 = vsub.s32 0, %v65
    %v67 = vrot.slane %v62, %v66
    %v68 = vlaneseq
    %v69 = vshrl.u32 %v68, 7
    %v70 = vsub.s32 1, %v69
    %v71 = vrot.slane %v62, %v70
    %v106 = vunpack.c.l.b16 %v22
    %v107 = vunpack.c.l.b16 %v23
    %v108 = vunpack.c.l.b16 %v24
    %v109 = vunpack.c.l.b16 %v25
    %v110 = vunpack.c.l.b16 %v26
    %v111 = vunpack.c.l.b16 %v27
    %v112 = vunpack.c.l.b16 %v28
    %v113 = vunpack.c.l.b16 %v29
    %v114 = vunpack.c.l.b16 %v30
    %v115 = vunpack.c.l.b16 %v31
    %v116 = vunpack.c.l.b16 %v32
    %v117 = vunpack.c.l.b16 %v33
    %v118 = vunpack.c.l.b16 %v34
    %v119 = vunpack.c.l.b16 %v35
    %v120 = vunpack.c.l.b16 %v36
    %v121 = vunpack.c.l.b16 %v37
    %v122 = vunpack.c.l.b16 %v38
    %v123 = vunpack.c.l.b16 %v39
    %v124 = vunpack.c.l.b16 %v40
    %v125 = vunpack.c.l.b16 %v41
    %v126 = vunpack.c.l.b16 %v42
    %v127 = vunpack.c.l.b16 %v43
    %v128 = vunpack.c.l.b16 %v44
    %v129 = vunpack.c.l.b16 %v45
    %v130 = vunpack.c.l.b16 %v46
    %v131 = vunpack.c.l.b16 %v47
    %v132 = vunpack.c.l.b16 %v48
    %v133 = vunpack.c.l.b16 %v49
    %v134 = vunpack.c.l.b16 %v50
    %v135 = vunpack.c.l.b16 %v51
    %v136 = vunpack.c.l.b16 %v52
    %v137 = vunpack.c.l.b16 %v53
    %v138 = vpack.c.b16 %v107, %v106
    %v139 = vpack.c.b16 %v109, %v108
    %v140 = vpack.c.b16 %v111, %v110
    %v141 = vpack.c.b16 %v113, %v112
    %v142 = vpack.c.b16 %v115, %v114
    %v143 = vpack.c.b16 %v117, %v116
    %v144 = vpack.c.b16 %v119, %v118
    %v145 = vpack.c.b16 %v121, %v120
    %v146 = vpack.c.b16 %v123, %v122
    %v147 = vpack.c.b16 %v125, %v124
    %v148 = vpack.c.b16 %v127, %v126
    %v149 = vpack.c.b16 %v129, %v128
    %v150 = vpack.c.b16 %v131, %v130
    %v151 = vpack.c.b16 %v133, %v132
    %v152 = vpack.c.b16 %v135, %v134
    %v153 = vpack.c.b16 %v137, %v136
    %v162 = vunpack.c.l.b16 %v54
    %v163 = vunpack.c.h.b16 %v54
    %v164 = vunpack.c.l.b16 %v55
    %v165 = vunpack.c.h.b16 %v55
    %v166 = vunpack.c.l.b16 %v56
    %v167 = vunpack.c.h.b16 %v56
    %v168 = vunpack.c.l.b16 %v57
    %v169 = vunpack.c.h.b16 %v57
    %v170 = vunpack.c.l.b16 %v58
    %v171 = vunpack.c.h.b16 %v58
    %v172 = vunpack.c.l.b16 %v59
    %v173 = vunpack.c.h.b16 %v59
    %v174 = vunpack.c.l.b16 %v60
    %v175 = vunpack.c.h.b16 %v60
    %v176 = vunpack.c.l.b16 %v61
    %v177 = vunpack.c.h.b16 %v61
    %v178 = vpack.c.b16 %v164, %v162
    %v179 = vpack.c.b16 %v165, %v163
    %v180 = vpack.c.b16 %v168, %v166
    %v181 = vpack.c.b16 %v169, %v167
    %v182 = vpack.c.b16 %v172, %v170
    %v183 = vpack.c.b16 %v173, %v171
    %v184 = vpack.c.b16 %v176, %v174
    %v185 = vpack.c.b16 %v177, %v175
    %vm194 = vcmask 523264
    %v196 = vsel %vm194, %v138, 0
    %v199 = vsel %vm194, %v139, 0
    %v202 = vsel %vm194, %v140, 0
    %v205 = vsel %vm194, %v141, 0
    %v208 = vsel %vm194, %v142, 0
    %v211 = vsel %vm194, %v143, 0
    %v214 = vsel %vm194, %v144, 0
    %v217 = vsel %vm194, %v145, 0
    %v220 = vsel %vm194, %v146, 0
    %v223 = vsel %vm194, %v147, 0
    %v226 = vsel %vm194, %v148, 0
    %v229 = vsel %vm194, %v149, 0
    %v232 = vsel %vm194, %v150, 0
    %v235 = vsel %vm194, %v151, 0
    %v238 = vsel %vm194, %v152, 0
    %v241 = vsel %vm194, %v153, 0
    %243 = vmatprep.subr.bf16.mxu0 %v179
    %244 = vmatpush1.bf16.msra.mxu0 %v178
    %245 = vmatprep.subr.bf16.mxu0 %v181
    %246 = vmatpush1.bf16.msra.mxu0 %v180
    %247 = vmatprep.subr.bf16.mxu0 %v183
    %248 = vmatpush1.bf16.msra.mxu0 %v182
    %249 = vmatprep.subr.bf16.mxu0 %v185
    %250 = vmatpush1.bf16.msra.mxu0 %v184
    %251 = vmatprep.subr.bf16.mxu0 0
    %252 = vmatpush1.bf16.msra.mxu0 0
    %253 = vmatprep.subr.bf16.mxu0 0
    %254 = vmatpush1.bf16.msra.mxu0 0
    %255 = vmatprep.subr.bf16.mxu0 0
    %256 = vmatpush1.bf16.msra.mxu0 0
    %257 = vmatprep.subr.bf16.mxu0 0
    %258 = vmatpush1.bf16.msra.mxu0 0
    %259 = vmatprep.subr.bf16.mxu0 0
    %260 = vmatpush1.bf16.msra.mxu0 0
    %261 = vmatprep.subr.bf16.mxu0 0
    %262 = vmatpush1.bf16.msra.mxu0 0
    %263 = vmatprep.subr.bf16.mxu0 0
    %264 = vmatpush1.bf16.msra.mxu0 0
    %265 = vmatprep.subr.bf16.mxu0 0
    %266 = vmatpush1.bf16.msra.mxu0 0
    %267 = vmatprep.subr.bf16.mxu0 0
    %268 = vmatpush1.bf16.msra.mxu0 0
    %269 = vmatprep.subr.bf16.mxu0 0
    %270 = vmatpush1.bf16.msra.mxu0 0
    %271 = vmatprep.subr.bf16.mxu0 0
    %272 = vmatpush1.bf16.msra.mxu0 0
    %273 = vmatprep.subr.bf16.mxu0 0
    %274 = vmatpush1.bf16.msra.mxu0 0
    %275 = vmatprep.mubr.bf16.mxu0 0
    %276 = vmatmul.mubr.bf16.gmra.mrb[0].mxu0 %v196
    %v277 = vpop.f32.mrb[0].mxu0
    %v278 = vadd.f32 %v67, %v277
    %v279 = vpop.f32.mrb[0].mxu0
    %v280 = vadd.f32 %v71, %v279
    %v281 = vpop.f32.mrb[0].mxu0
    %v282 = vadd.f32 %v67, %v281
    %v283 = vpop.f32.mrb[0].mxu0
    %v284 = vadd.f32 %v71, %v283
    %285 = vmatprep.mubr.bf16.mxu0 0
    %286 = vmatmul.mubr.bf16.gmra.mrb[0].mxu0 %v199
    %v287 = vpop.f32.mrb[0].mxu0
    %v288 = vadd.f32 %v67, %v287
    %v289 = vpop.f32.mrb[0].mxu0
    %v290 = vadd.f32 %v71, %v289
    %v291 = vpop.f32.mrb[0].mxu0
    %v292 = vadd.f32 %v67, %v291
    %v293 = vpop.f32.mrb[0].mxu0
    %v294 = vadd.f32 %v71, %v293
    %295 = vmatprep.mubr.bf16.mxu0 0
    %296 = vmatmul.mubr.bf16.gmra.mrb[0].mxu0 %v202
    %v297 = vpop.f32.mrb[0].mxu0
    %v298 = vadd.f32 %v67, %v297
    %v299 = vpop.f32.mrb[0].mxu0
    %v300 = vadd.f32 %v71, %v299
    %v301 = vpop.f32.mrb[0].mxu0
    %v302 = vadd.f32 %v67, %v301
    %v303 = vpop.f32.mrb[0].mxu0
    %v304 = vadd.f32 %v71, %v303
    %305 = vmatprep.mubr.bf16.mxu0 0
    %306 = vmatmul.mubr.bf16.gmra.mrb[0].mxu0 %v205
    %v307 = vpop.f32.mrb[0].mxu0
    %v308 = vadd.f32 %v67, %v307
    %v309 = vpop.f32.mrb[0].mxu0
    %v310 = vadd.f32 %v71, %v309
    %v311 = vpop.f32.mrb[0].mxu0
    %v312 = vadd.f32 %v67, %v311
    %v313 = vpop.f32.mrb[0].mxu0
    %v314 = vadd.f32 %v71, %v313
    %315 = vmatprep.mubr.bf16.mxu0 0
    %316 = vmatmul.mubr.bf16.gmra.mrb[0].mxu0 %v208
    %v317 = vpop.f32.mrb[0].mxu0
    %v318 = vadd.f32 %v67, %v317
    %v319 = vpop.f32.mrb[0].mxu0
    %v320 = vadd.f32 %v71, %v319
    %v321 = vpop.f32.mrb[0].mxu0
    %v322 = vadd.f32 %v67, %v321
    %v323 = vpop.f32.mrb[0].mxu0
    %v324 = vadd.f32 %v71, %v323
    %325 = vmatprep.mubr.bf16.mxu0 0
    %326 = vmatmul.mubr.bf16.gmra.mrb[0].mxu0 %v211
    %v327 = vpop.f32.mrb[0].mxu0
    %v328 = vadd.f32 %v67, %v327
    %v329 = vpop.f32.mrb[0].mxu0
    %v330 = vadd.f32 %v71, %v329
    %v331 = vpop.f32.mrb[0].mxu0
    %v332 = vadd.f32 %v67, %v331
    %v333 = vpop.f32.mrb[0].mxu0
    %v334 = vadd.f32 %v71, %v333
    %335 = vmatprep.mubr.bf16.mxu0 0
    %336 = vmatmul.mubr.bf16.gmra.mrb[0].mxu0 %v214
    %v337 = vpop.f32.mrb[0].mxu0
    %v338 = vadd.f32 %v67, %v337
    %v339 = vpop.f32.mrb[0].mxu0
    %v340 = vadd.f32 %v71, %v339
    %v341 = vpop.f32.mrb[0].mxu0
    %v342 = vadd.f32 %v67, %v341
    %v343 = vpop.f32.mrb[0].mxu0
    %v344 = vadd.f32 %v71, %v343
    %345 = vmatprep.mubr.bf16.mxu0 0
    %346 = vmatmul.mubr.bf16.gmra.mrb[0].mxu0 %v217
    %v347 = vpop.f32.mrb[0].mxu0
    %v348 = vadd.f32 %v67, %v347
    %v349 = vpop.f32.mrb[0].mxu0
    %v350 = vadd.f32 %v71, %v349
    %v351 = vpop.f32.mrb[0].mxu0
    %v352 = vadd.f32 %v67, %v351
    %v353 = vpop.f32.mrb[0].mxu0
    %v354 = vadd.f32 %v71, %v353
    %355 = vmatprep.mubr.bf16.mxu0 0
    %356 = vmatmul.mubr.bf16.gmra.mrb[0].mxu0 %v220
    %v357 = vpop.f32.mrb[0].mxu0
    %v358 = vadd.f32 %v67, %v357
    %v359 = vpop.f32.mrb[0].mxu0
    %v360 = vadd.f32 %v71, %v359
    %v361 = vpop.f32.mrb[0].mxu0
    %v362 = vadd.f32 %v67, %v361
    %v363 = vpop.f32.mrb[0].mxu0
    %v364 = vadd.f32 %v71, %v363
    %365 = vmatprep.mubr.bf16.mxu0 0
    %366 = vmatmul.mubr.bf16.gmra.mrb[0].mxu0 %v223
    %v367 = vpop.f32.mrb[0].mxu0
    %v368 = vadd.f32 %v67, %v367
    %v369 = vpop.f32.mrb[0].mxu0
    %v370 = vadd.f32 %v71, %v369
    %v371 = vpop.f32.mrb[0].mxu0
    %v372 = vadd.f32 %v67, %v371
    %v373 = vpop.f32.mrb[0].mxu0
    %v374 = vadd.f32 %v71, %v373
    %375 = vmatprep.mubr.bf16.mxu0 0
    %376 = vmatmul.mubr.bf16.gmra.mrb[0].mxu0 %v226
    %v377 = vpop.f32.mrb[0].mxu0
    %v378 = vadd.f32 %v67, %v377
    %v379 = vpop.f32.mrb[0].mxu0
    %v380 = vadd.f32 %v71, %v379
    %v381 = vpop.f32.mrb[0].mxu0
    %v382 = vadd.f32 %v67, %v381
    %v383 = vpop.f32.mrb[0].mxu0
    %v384 = vadd.f32 %v71, %v383
    %385 = vmatprep.mubr.bf16.mxu0 0
    %386 = vmatmul.mubr.bf16.gmra.mrb[0].mxu0 %v229
    %v387 = vpop.f32.mrb[0].mxu0
    %v388 = vadd.f32 %v67, %v387
    %v389 = vpop.f32.mrb[0].mxu0
    %v390 = vadd.f32 %v71, %v389
    %v391 = vpop.f32.mrb[0].mxu0
    %v392 = vadd.f32 %v67, %v391
    %v393 = vpop.f32.mrb[0].mxu0
    %v394 = vadd.f32 %v71, %v393
    %395 = vmatprep.mubr.bf16.mxu0 0
    %396 = vmatmul.mubr.bf16.gmra.mrb[0].mxu0 %v232
    %v397 = vpop.f32.mrb[0].mxu0
    %v398 = vadd.f32 %v67, %v397
    %v399 = vpop.f32.mrb[0].mxu0
    %v400 = vadd.f32 %v71, %v399
    %v401 = vpop.f32.mrb[0].mxu0
    %v402 = vadd.f32 %v67, %v401
    %v403 = vpop.f32.mrb[0].mxu0
    %v404 = vadd.f32 %v71, %v403
    %405 = vmatprep.mubr.bf16.mxu0 0
    %406 = vmatmul.mubr.bf16.gmra.mrb[0].mxu0 %v235
    %v407 = vpop.f32.mrb[0].mxu0
    %v408 = vadd.f32 %v67, %v407
    %v409 = vpop.f32.mrb[0].mxu0
    %v410 = vadd.f32 %v71, %v409
    %v411 = vpop.f32.mrb[0].mxu0
    %v412 = vadd.f32 %v67, %v411
    %v413 = vpop.f32.mrb[0].mxu0
    %v414 = vadd.f32 %v71, %v413
    %415 = vmatprep.mubr.bf16.mxu0 0
    %416 = vmatmul.mubr.bf16.gmra.mrb[0].mxu0 %v238
    %v417 = vpop.f32.mrb[0].mxu0
    %v418 = vadd.f32 %v67, %v417
    %v419 = vpop.f32.mrb[0].mxu0
    %v420 = vadd.f32 %v71, %v419
    %v421 = vpop.f32.mrb[0].mxu0
    %v422 = vadd.f32 %v67, %v421
    %v423 = vpop.f32.mrb[0].mxu0
    %v424 = vadd.f32 %v71, %v423
    %425 = vmatprep.mubr.bf16.mxu0 0
    %426 = vmatmul.mubr.bf16.gmra.mrb[0].mxu0 %v241
    %v427 = vpop.f32.mrb[0].mxu0
    %v428 = vadd.f32 %v67, %v427
    %v429 = vpop.f32.mrb[0].mxu0
    %v430 = vadd.f32 %v71, %v429
    %v431 = vpop.f32.mrb[0].mxu0
    %v432 = vadd.f32 %v67, %v431
    %v433 = vpop.f32.mrb[0].mxu0
    %v434 = vadd.f32 %v71, %v433
    %435 = vdwg.mxu0
    %v436 = vmul.f32 %v278, 0.5
    %v437 = vmul.f32 %v280, 0.5
    %v438 = vmul.f32 %v282, 0.5
    %v439 = vmul.f32 %v284, 0.5
    %v440 = vmul.f32 %v288, 0.5
    %v441 = vmul.f32 %v290, 0.5
    %v442 = vmul.f32 %v292, 0.5
    %v443 = vmul.f32 %v294, 0.5
    %v444 = vmul.f32 %v298, 0.5
    %v445 = vmul.f32 %v300, 0.5
    %v446 = vmul.f32 %v302, 0.5
    %v447 = vmul.f32 %v304, 0.5
    %v448 = vmul.f32 %v308, 0.5
    %v449 = vmul.f32 %v310, 0.5
    %v450 = vmul.f32 %v312, 0.5
    %v451 = vmul.f32 %v314, 0.5
    %v452 = vmul.f32 %v318, 0.5
    %v453 = vmul.f32 %v320, 0.5
    %v454 = vmul.f32 %v322, 0.5
    %v455 = vmul.f32 %v324, 0.5
    %v456 = vmul.f32 %v328, 0.5
    %v457 = vmul.f32 %v330, 0.5
    %v458 = vmul.f32 %v332, 0.5
    %v459 = vmul.f32 %v334, 0.5
    %v460 = vmul.f32 %v338, 0.5
    %v461 = vmul.f32 %v340, 0.5
    %v462 = vmul.f32 %v342, 0.5
    %v463 = vmul.f32 %v344, 0.5
    %v464 = vmul.f32 %v348, 0.5
    %v465 = vmul.f32 %v350, 0.5
    %v466 = vmul.f32 %v352, 0.5
    %v467 = vmul.f32 %v354, 0.5
    %v468 = vmul.f32 %v358, 0.5
    %v469 = vmul.f32 %v360, 0.5
    %v470 = vmul.f32 %v362, 0.5
    %v471 = vmul.f32 %v364, 0.5
    %v472 = vmul.f32 %v368, 0.5
    %v473 = vmul.f32 %v370, 0.5
    %v474 = vmul.f32 %v372, 0.5
    %v475 = vmul.f32 %v374, 0.5
    %v476 = vmul.f32 %v378, 0.5
    %v477 = vmul.f32 %v380, 0.5
    %v478 = vmul.f32 %v382, 0.5
    %v479 = vmul.f32 %v384, 0.5
    %v480 = vmul.f32 %v388, 0.5
    %v481 = vmul.f32 %v390, 0.5
    %v482 = vmul.f32 %v392, 0.5
    %v483 = vmul.f32 %v394, 0.5
    %v484 = vmul.f32 %v398, 0.5
    %v485 = vmul.f32 %v400, 0.5
    %v486 = vmul.f32 %v402, 0.5
    %v487 = vmul.f32 %v404, 0.5
    %v488 = vmul.f32 %v408, 0.5
    %v489 = vmul.f32 %v410, 0.5
    %v490 = vmul.f32 %v412, 0.5
    %v491 = vmul.f32 %v414, 0.5
    %v492 = vmul.f32 %v418, 0.5
    %v493 = vmul.f32 %v420, 0.5
    %v494 = vmul.f32 %v422, 0.5
    %v495 = vmul.f32 %v424, 0.5
    %v496 = vmul.f32 %v428, 0.5
    %v497 = vmul.f32 %v430, 0.5
    %v498 = vmul.f32 %v432, 0.5
    %v499 = vmul.f32 %v434, 0.5
    %v500 = vmul.f32 %v278, 0.044715
    %v501 = vmul.f32 %v280, 0.044715
    %v502 = vmul.f32 %v282, 0.044715
    %v503 = vmul.f32 %v284, 0.044715
    %v504 = vmul.f32 %v288, 0.044715
    %v505 = vmul.f32 %v290, 0.044715
    %v506 = vmul.f32 %v292, 0.044715
    %v507 = vmul.f32 %v294, 0.044715
    %v508 = vmul.f32 %v298, 0.044715
    %v509 = vmul.f32 %v300, 0.044715
    %v510 = vmul.f32 %v302, 0.044715
    %v511 = vmul.f32 %v304, 0.044715
    %v512 = vmul.f32 %v308, 0.044715
    %v513 = vmul.f32 %v310, 0.044715
    %v514 = vmul.f32 %v312, 0.044715
    %v515 = vmul.f32 %v314, 0.044715
    %v516 = vmul.f32 %v318, 0.044715
    %v517 = vmul.f32 %v320, 0.044715
    %v518 = vmul.f32 %v322, 0.044715
    %v519 = vmul.f32 %v324, 0.044715
    %v520 = vmul.f32 %v328, 0.044715
    %v521 = vmul.f32 %v330, 0.044715
    %v522 = vmul.f32 %v332, 0.044715
    %v523 = vmul.f32 %v334, 0.044715
    %v524 = vmul.f32 %v338, 0.044715
    %v525 = vmul.f32 %v340, 0.044715
    %v526 = vmul.f32 %v342, 0.044715
    %v527 = vmul.f32 %v344, 0.044715
    %v528 = vmul.f32 %v348, 0.044715
    %v529 = vmul.f32 %v350, 0.044715
    %v530 = vmul.f32 %v352, 0.044715
    %v531 = vmul.f32 %v354, 0.044715
    %v532 = vmul.f32 %v358, 0.044715
    %v533 = vmul.f32 %v360, 0.044715
    %v534 = vmul.f32 %v362, 0.044715
    %v535 = vmul.f32 %v364, 0.044715
    %v536 = vmul.f32 %v368, 0.044715
    %v537 = vmul.f32 %v370, 0.044715
    %v538 = vmul.f32 %v372, 0.044715
    %v539 = vmul.f32 %v374, 0.044715
    %v540 = vmul.f32 %v378, 0.044715
    %v541 = vmul.f32 %v380, 0.044715
    %v542 = vmul.f32 %v382, 0.044715
    %v543 = vmul.f32 %v384, 0.044715
    %v544 = vmul.f32 %v388, 0.044715
    %v545 = vmul.f32 %v390, 0.044715
    %v546 = vmul.f32 %v392, 0.044715
    %v547 = vmul.f32 %v394, 0.044715
    %v548 = vmul.f32 %v398, 0.044715
    %v549 = vmul.f32 %v400, 0.044715
    %v550 = vmul.f32 %v402, 0.044715
    %v551 = vmul.f32 %v404, 0.044715
    %v552 = vmul.f32 %v408, 0.044715
    %v553 = vmul.f32 %v410, 0.044715
    %v554 = vmul.f32 %v412, 0.044715
    %v555 = vmul.f32 %v414, 0.044715
    %v556 = vmul.f32 %v418, 0.044715
    %v557 = vmul.f32 %v420, 0.044715
    %v558 = vmul.f32 %v422, 0.044715
    %v559 = vmul.f32 %v424, 0.044715
    %v560 = vmul.f32 %v428, 0.044715
    %v561 = vmul.f32 %v430, 0.044715
    %v562 = vmul.f32 %v432, 0.044715
    %v563 = vmul.f32 %v434, 0.044715
    %v564 = vmul.f32 %v500, %v278
    %v565 = vmul.f32 %v501, %v280
    %v566 = vmul.f32 %v502, %v282
    %v567 = vmul.f32 %v503, %v284
    %v568 = vmul.f32 %v504, %v288
    %v569 = vmul.f32 %v505, %v290
    %v570 = vmul.f32 %v506, %v292
    %v571 = vmul.f32 %v507, %v294
    %v572 = vmul.f32 %v508, %v298
    %v573 = vmul.f32 %v509, %v300
    %v574 = vmul.f32 %v510, %v302
    %v575 = vmul.f32 %v511, %v304
    %v576 = vmul.f32 %v512, %v308
    %v577 = vmul.f32 %v513, %v310
    %v578 = vmul.f32 %v514, %v312
    %v579 = vmul.f32 %v515, %v314
    %v580 = vmul.f32 %v516, %v318
    %v581 = vmul.f32 %v517, %v320
    %v582 = vmul.f32 %v518, %v322
    %v583 = vmul.f32 %v519, %v324
    %v584 = vmul.f32 %v520, %v328
    %v585 = vmul.f32 %v521, %v330
    %v586 = vmul.f32 %v522, %v332
    %v587 = vmul.f32 %v523, %v334
    %v588 = vmul.f32 %v524, %v338
    %v589 = vmul.f32 %v525, %v340
    %v590 = vmul.f32 %v526, %v342
    %v591 = vmul.f32 %v527, %v344
    %v592 = vmul.f32 %v528, %v348
    %v593 = vmul.f32 %v529, %v350
    %v594 = vmul.f32 %v530, %v352
    %v595 = vmul.f32 %v531, %v354
    %v596 = vmul.f32 %v532, %v358
    %v597 = vmul.f32 %v533, %v360
    %v598 = vmul.f32 %v534, %v362
    %v599 = vmul.f32 %v535, %v364
    %v600 = vmul.f32 %v536, %v368
    %v601 = vmul.f32 %v537, %v370
    %v602 = vmul.f32 %v538, %v372
    %v603 = vmul.f32 %v539, %v374
    %v604 = vmul.f32 %v540, %v378
    %v605 = vmul.f32 %v541, %v380
    %v606 = vmul.f32 %v542, %v382
    %v607 = vmul.f32 %v543, %v384
    %v608 = vmul.f32 %v544, %v388
    %v609 = vmul.f32 %v545, %v390
    %v610 = vmul.f32 %v546, %v392
    %v611 = vmul.f32 %v547, %v394
    %v612 = vmul.f32 %v548, %v398
    %v613 = vmul.f32 %v549, %v400
    %v614 = vmul.f32 %v550, %v402
    %v615 = vmul.f32 %v551, %v404
    %v616 = vmul.f32 %v552, %v408
    %v617 = vmul.f32 %v553, %v410
    %v618 = vmul.f32 %v554, %v412
    %v619 = vmul.f32 %v555, %v414
    %v620 = vmul.f32 %v556, %v418
    %v621 = vmul.f32 %v557, %v420
    %v622 = vmul.f32 %v558, %v422
    %v623 = vmul.f32 %v559, %v424
    %v624 = vmul.f32 %v560, %v428
    %v625 = vmul.f32 %v561, %v430
    %v626 = vmul.f32 %v562, %v432
    %v627 = vmul.f32 %v563, %v434
    %v628 = vmul.f32 %v564, %v278
    %v629 = vmul.f32 %v565, %v280
    %v630 = vmul.f32 %v566, %v282
    %v631 = vmul.f32 %v567, %v284
    %v632 = vmul.f32 %v568, %v288
    %v633 = vmul.f32 %v569, %v290
    %v634 = vmul.f32 %v570, %v292
    %v635 = vmul.f32 %v571, %v294
    %v636 = vmul.f32 %v572, %v298
    %v637 = vmul.f32 %v573, %v300
    %v638 = vmul.f32 %v574, %v302
    %v639 = vmul.f32 %v575, %v304
    %v640 = vmul.f32 %v576, %v308
    %v641 = vmul.f32 %v577, %v310
    %v642 = vmul.f32 %v578, %v312
    %v643 = vmul.f32 %v579, %v314
    %v644 = vmul.f32 %v580, %v318
    %v645 = vmul.f32 %v581, %v320
    %v646 = vmul.f32 %v582, %v322
    %v647 = vmul.f32 %v583, %v324
    %v648 = vmul.f32 %v584, %v328
    %v649 = vmul.f32 %v585, %v330
    %v650 = vmul.f32 %v586, %v332
    %v651 = vmul.f32 %v587, %v334
    %v652 = vmul.f32 %v588, %v338
    %v653 = vmul.f32 %v589, %v340
    %v654 = vmul.f32 %v590, %v342
    %v655 = vmul.f32 %v591, %v344
    %v656 = vmul.f32 %v592, %v348
    %v657 = vmul.f32 %v593, %v350
    %v658 = vmul.f32 %v594, %v352
    %v659 = vmul.f32 %v595, %v354
    %v660 = vmul.f32 %v596, %v358
    %v661 = vmul.f32 %v597, %v360
    %v662 = vmul.f32 %v598, %v362
    %v663 = vmul.f32 %v599, %v364
    %v664 = vmul.f32 %v600, %v368
    %v665 = vmul.f32 %v601, %v370
    %v666 = vmul.f32 %v602, %v372
    %v667 = vmul.f32 %v603, %v374
    %v668 = vmul.f32 %v604, %v378
    %v669 = vmul.f32 %v605, %v380
    %v670 = vmul.f32 %v606, %v382
    %v671 = vmul.f32 %v607, %v384
    %v672 = vmul.f32 %v608, %v388
    %v673 = vmul.f32 %v609, %v390
    %v674 = vmul.f32 %v610, %v392
    %v675 = vmul.f32 %v611, %v394
    %v676 = vmul.f32 %v612, %v398
    %v677 = vmul.f32 %v613, %v400
    %v678 = vmul.f32 %v614, %v402
    %v679 = vmul.f32 %v615, %v404
    %v680 = vmul.f32 %v616, %v408
    %v681 = vmul.f32 %v617, %v410
    %v682 = vmul.f32 %v618, %v412
    %v683 = vmul.f32 %v619, %v414
    %v684 = vmul.f32 %v620, %v418
    %v685 = vmul.f32 %v621, %v420
    %v686 = vmul.f32 %v622, %v422
    %v687 = vmul.f32 %v623, %v424
    %v688 = vmul.f32 %v624, %v428
    %v689 = vmul.f32 %v625, %v430
    %v690 = vmul.f32 %v626, %v432
    %v691 = vmul.f32 %v627, %v434
    %v692 = vadd.f32 %v278, %v628
    %v693 = vadd.f32 %v280, %v629
    %v694 = vadd.f32 %v282, %v630
    %v695 = vadd.f32 %v284, %v631
    %v696 = vadd.f32 %v288, %v632
    %v697 = vadd.f32 %v290, %v633
    %v698 = vadd.f32 %v292, %v634
    %v699 = vadd.f32 %v294, %v635
    %v700 = vadd.f32 %v298, %v636
    %v701 = vadd.f32 %v300, %v637
    %v702 = vadd.f32 %v302, %v638
    %v703 = vadd.f32 %v304, %v639
    %v704 = vadd.f32 %v308, %v640
    %v705 = vadd.f32 %v310, %v641
    %v706 = vadd.f32 %v312, %v642
    %v707 = vadd.f32 %v314, %v643
    %v708 = vadd.f32 %v318, %v644
    %v709 = vadd.f32 %v320, %v645
    %v710 = vadd.f32 %v322, %v646
    %v711 = vadd.f32 %v324, %v647
    %v712 = vadd.f32 %v328, %v648
    %v713 = vadd.f32 %v330, %v649
    %v714 = vadd.f32 %v332, %v650
    %v715 = vadd.f32 %v334, %v651
    %v716 = vadd.f32 %v338, %v652
    %v717 = vadd.f32 %v340, %v653
    %v718 = vadd.f32 %v342, %v654
    %v719 = vadd.f32 %v344, %v655
    %v720 = vadd.f32 %v348, %v656
    %v721 = vadd.f32 %v350, %v657
    %v722 = vadd.f32 %v352, %v658
    %v723 = vadd.f32 %v354, %v659
    %v724 = vadd.f32 %v358, %v660
    %v725 = vadd.f32 %v360, %v661
    %v726 = vadd.f32 %v362, %v662
    %v727 = vadd.f32 %v364, %v663
    %v728 = vadd.f32 %v368, %v664
    %v729 = vadd.f32 %v370, %v665
    %v730 = vadd.f32 %v372, %v666
    %v731 = vadd.f32 %v374, %v667
    %v732 = vadd.f32 %v378, %v668
    %v733 = vadd.f32 %v380, %v669
    %v734 = vadd.f32 %v382, %v670
    %v735 = vadd.f32 %v384, %v671
    %v736 = vadd.f32 %v388, %v672
    %v737 = vadd.f32 %v390, %v673
    %v738 = vadd.f32 %v392, %v674
    %v739 = vadd.f32 %v394, %v675
    %v740 = vadd.f32 %v398, %v676
    %v741 = vadd.f32 %v400, %v677
    %v742 = vadd.f32 %v402, %v678
    %v743 = vadd.f32 %v404, %v679
    %v744 = vadd.f32 %v408, %v680
    %v745 = vadd.f32 %v410, %v681
    %v746 = vadd.f32 %v412, %v682
    %v747 = vadd.f32 %v414, %v683
    %v748 = vadd.f32 %v418, %v684
    %v749 = vadd.f32 %v420, %v685
    %v750 = vadd.f32 %v422, %v686
    %v751 = vadd.f32 %v424, %v687
    %v752 = vadd.f32 %v428, %v688
    %v753 = vadd.f32 %v430, %v689
    %v754 = vadd.f32 %v432, %v690
    %v755 = vadd.f32 %v434, %v691
    %v756 = vmul.f32 %v692, 0.7978846
    %v757 = vmul.f32 %v693, 0.7978846
    %v758 = vmul.f32 %v694, 0.7978846
    %v759 = vmul.f32 %v695, 0.7978846
    %v760 = vmul.f32 %v696, 0.7978846
    %v761 = vmul.f32 %v697, 0.7978846
    %v762 = vmul.f32 %v698, 0.7978846
    %v763 = vmul.f32 %v699, 0.7978846
    %v764 = vmul.f32 %v700, 0.7978846
    %v765 = vmul.f32 %v701, 0.7978846
    %v766 = vmul.f32 %v702, 0.7978846
    %v767 = vmul.f32 %v703, 0.7978846
    %v768 = vmul.f32 %v704, 0.7978846
    %v769 = vmul.f32 %v705, 0.7978846
    %v770 = vmul.f32 %v706, 0.7978846
    %v771 = vmul.f32 %v707, 0.7978846
    %v772 = vmul.f32 %v708, 0.7978846
    %v773 = vmul.f32 %v709, 0.7978846
    %v774 = vmul.f32 %v710, 0.7978846
    %v775 = vmul.f32 %v711, 0.7978846
    %v776 = vmul.f32 %v712, 0.7978846
    %v777 = vmul.f32 %v713, 0.7978846
    %v778 = vmul.f32 %v714, 0.7978846
    %v779 = vmul.f32 %v715, 0.7978846
    %v780 = vmul.f32 %v716, 0.7978846
    %v781 = vmul.f32 %v717, 0.7978846
    %v782 = vmul.f32 %v718, 0.7978846
    %v783 = vmul.f32 %v719, 0.7978846
    %v784 = vmul.f32 %v720, 0.7978846
    %v785 = vmul.f32 %v721, 0.7978846
    %v786 = vmul.f32 %v722, 0.7978846
    %v787 = vmul.f32 %v723, 0.7978846
    %v788 = vmul.f32 %v724, 0.7978846
    %v789 = vmul.f32 %v725, 0.7978846
    %v790 = vmul.f32 %v726, 0.7978846
    %v791 = vmul.f32 %v727, 0.7978846
    %v792 = vmul.f32 %v728, 0.7978846
    %v793 = vmul.f32 %v729, 0.7978846
    %v794 = vmul.f32 %v730, 0.7978846
    %v795 = vmul.f32 %v731, 0.7978846
    %v796 = vmul.f32 %v732, 0.7978846
    %v797 = vmul.f32 %v733, 0.7978846
    %v798 = vmul.f32 %v734, 0.7978846
    %v799 = vmul.f32 %v735, 0.7978846
    %v800 = vmul.f32 %v736, 0.7978846
    %v801 = vmul.f32 %v737, 0.7978846
    %v802 = vmul.f32 %v738, 0.7978846
    %v803 = vmul.f32 %v739, 0.7978846
    %v804 = vmul.f32 %v740, 0.7978846
    %v805 = vmul.f32 %v741, 0.7978846
    %v806 = vmul.f32 %v742, 0.7978846
    %v807 = vmul.f32 %v743, 0.7978846
    %v808 = vmul.f32 %v744, 0.7978846
    %v809 = vmul.f32 %v745, 0.7978846
    %v810 = vmul.f32 %v746, 0.7978846
    %v811 = vmul.f32 %v747, 0.7978846
    %v812 = vmul.f32 %v748, 0.7978846
    %v813 = vmul.f32 %v749, 0.7978846
    %v814 = vmul.f32 %v750, 0.7978846
    %v815 = vmul.f32 %v751, 0.7978846
    %v816 = vmul.f32 %v752, 0.7978846
    %v817 = vmul.f32 %v753, 0.7978846
    %v818 = vmul.f32 %v754, 0.7978846
    %v819 = vmul.f32 %v755, 0.7978846
    %v820 = vtanh.pop %v756
    %v821 = vtanh.pop %v757
    %v822 = vtanh.pop %v758
    %v823 = vtanh.pop %v759
    %v824 = vtanh.pop %v760
    %v825 = vtanh.pop %v761
    %v826 = vtanh.pop %v762
    %v827 = vtanh.pop %v763
    %v828 = vtanh.pop %v764
    %v829 = vtanh.pop %v765
    %v830 = vtanh.pop %v766
    %v831 = vtanh.pop %v767
    %v832 = vtanh.pop %v768
    %v833 = vtanh.pop %v769
    %v834 = vtanh.pop %v770
    %v835 = vtanh.pop %v771
    %v836 = vtanh.pop %v772
    %v837 = vtanh.pop %v773
    %v838 = vtanh.pop %v774
    %v839 = vtanh.pop %v775
    %v840 = vtanh.pop %v776
    %v841 = vtanh.pop %v777
    %v842 = vtanh.pop %v778
    %v843 = vtanh.pop %v779
    %v844 = vtanh.pop %v780
    %v845 = vtanh.pop %v781
    %v846 = vtanh.pop %v782
    %v847 = vtanh.pop %v783
    %v848 = vtanh.pop %v784
    %v849 = vtanh.pop %v785
    %v850 = vtanh.pop %v786
    %v851 = vtanh.pop %v787
    %v852 = vtanh.pop %v788
    %v853 = vtanh.pop %v789
    %v854 = vtanh.pop %v790
    %v855 = vtanh.pop %v791
    %v856 = vtanh.pop %v792
    %v857 = vtanh.pop %v793
    %v858 = vtanh.pop %v794
    %v859 = vtanh.pop %v795
    %v860 = vtanh.pop %v796
    %v861 = vtanh.pop %v797
    %v862 = vtanh.pop %v798
    %v863 = vtanh.pop %v799
    %v864 = vtanh.pop %v800
    %v865 = vtanh.pop %v801
    %v866 = vtanh.pop %v802
    %v867 = vtanh.pop %v803
    %v868 = vtanh.pop %v804
    %v869 = vtanh.pop %v805
    %v870 = vtanh.pop %v806
    %v871 = vtanh.pop %v807
    %v872 = vtanh.pop %v808
    %v873 = vtanh.pop %v809
    %v874 = vtanh.pop %v810
    %v875 = vtanh.pop %v811
    %v876 = vtanh.pop %v812
    %v877 = vtanh.pop %v813
    %v878 = vtanh.pop %v814
    %v879 = vtanh.pop %v815
    %v880 = vtanh.pop %v816
    %v881 = vtanh.pop %v817
    %v882 = vtanh.pop %v818
    %v883 = vtanh.pop %v819
    %v884 = vadd.f32 %v820, 1.0
    %v885 = vadd.f32 %v821, 1.0
    %v886 = vadd.f32 %v822, 1.0
    %v887 = vadd.f32 %v823, 1.0
    %v888 = vadd.f32 %v824, 1.0
    %v889 = vadd.f32 %v825, 1.0
    %v890 = vadd.f32 %v826, 1.0
    %v891 = vadd.f32 %v827, 1.0
    %v892 = vadd.f32 %v828, 1.0
    %v893 = vadd.f32 %v829, 1.0
    %v894 = vadd.f32 %v830, 1.0
    %v895 = vadd.f32 %v831, 1.0
    %v896 = vadd.f32 %v832, 1.0
    %v897 = vadd.f32 %v833, 1.0
    %v898 = vadd.f32 %v834, 1.0
    %v899 = vadd.f32 %v835, 1.0
    %v900 = vadd.f32 %v836, 1.0
    %v901 = vadd.f32 %v837, 1.0
    %v902 = vadd.f32 %v838, 1.0
    %v903 = vadd.f32 %v839, 1.0
    %v904 = vadd.f32 %v840, 1.0
    %v905 = vadd.f32 %v841, 1.0
    %v906 = vadd.f32 %v842, 1.0
    %v907 = vadd.f32 %v843, 1.0
    %v908 = vadd.f32 %v844, 1.0
    %v909 = vadd.f32 %v845, 1.0
    %v910 = vadd.f32 %v846, 1.0
    %v911 = vadd.f32 %v847, 1.0
    %v912 = vadd.f32 %v848, 1.0
    %v913 = vadd.f32 %v849, 1.0
    %v914 = vadd.f32 %v850, 1.0
    %v915 = vadd.f32 %v851, 1.0
    %v916 = vadd.f32 %v852, 1.0
    %v917 = vadd.f32 %v853, 1.0
    %v918 = vadd.f32 %v854, 1.0
    %v919 = vadd.f32 %v855, 1.0
    %v920 = vadd.f32 %v856, 1.0
    %v921 = vadd.f32 %v857, 1.0
    %v922 = vadd.f32 %v858, 1.0
    %v923 = vadd.f32 %v859, 1.0
    %v924 = vadd.f32 %v860, 1.0
    %v925 = vadd.f32 %v861, 1.0
    %v926 = vadd.f32 %v862, 1.0
    %v927 = vadd.f32 %v863, 1.0
    %v928 = vadd.f32 %v864, 1.0
    %v929 = vadd.f32 %v865, 1.0
    %v930 = vadd.f32 %v866, 1.0
    %v931 = vadd.f32 %v867, 1.0
    %v932 = vadd.f32 %v868, 1.0
    %v933 = vadd.f32 %v869, 1.0
    %v934 = vadd.f32 %v870, 1.0
    %v935 = vadd.f32 %v871, 1.0
    %v936 = vadd.f32 %v872, 1.0
    %v937 = vadd.f32 %v873, 1.0
    %v938 = vadd.f32 %v874, 1.0
    %v939 = vadd.f32 %v875, 1.0
    %v940 = vadd.f32 %v876, 1.0
    %v941 = vadd.f32 %v877, 1.0
    %v942 = vadd.f32 %v878, 1.0
    %v943 = vadd.f32 %v879, 1.0
    %v944 = vadd.f32 %v880, 1.0
    %v945 = vadd.f32 %v881, 1.0
    %v946 = vadd.f32 %v882, 1.0
    %v947 = vadd.f32 %v883, 1.0
    %v948 = vmul.f32 %v436, %v884
    %v949 = vmul.f32 %v437, %v885
    %v950 = vmul.f32 %v438, %v886
    %v951 = vmul.f32 %v439, %v887
    %v952 = vmul.f32 %v440, %v888
    %v953 = vmul.f32 %v441, %v889
    %v954 = vmul.f32 %v442, %v890
    %v955 = vmul.f32 %v443, %v891
    %v956 = vmul.f32 %v444, %v892
    %v957 = vmul.f32 %v445, %v893
    %v958 = vmul.f32 %v446, %v894
    %v959 = vmul.f32 %v447, %v895
    %v960 = vmul.f32 %v448, %v896
    %v961 = vmul.f32 %v449, %v897
    %v962 = vmul.f32 %v450, %v898
    %v963 = vmul.f32 %v451, %v899
    %v964 = vmul.f32 %v452, %v900
    %v965 = vmul.f32 %v453, %v901
    %v966 = vmul.f32 %v454, %v902
    %v967 = vmul.f32 %v455, %v903
    %v968 = vmul.f32 %v456, %v904
    %v969 = vmul.f32 %v457, %v905
    %v970 = vmul.f32 %v458, %v906
    %v971 = vmul.f32 %v459, %v907
    %v972 = vmul.f32 %v460, %v908
    %v973 = vmul.f32 %v461, %v909
    %v974 = vmul.f32 %v462, %v910
    %v975 = vmul.f32 %v463, %v911
    %v976 = vmul.f32 %v464, %v912
    %v977 = vmul.f32 %v465, %v913
    %v978 = vmul.f32 %v466, %v914
    %v979 = vmul.f32 %v467, %v915
    %v980 = vmul.f32 %v468, %v916
    %v981 = vmul.f32 %v469, %v917
    %v982 = vmul.f32 %v470, %v918
    %v983 = vmul.f32 %v471, %v919
    %v984 = vmul.f32 %v472, %v920
    %v985 = vmul.f32 %v473, %v921
    %v986 = vmul.f32 %v474, %v922
    %v987 = vmul.f32 %v475, %v923
    %v988 = vmul.f32 %v476, %v924
    %v989 = vmul.f32 %v477, %v925
    %v990 = vmul.f32 %v478, %v926
    %v991 = vmul.f32 %v479, %v927
    %v992 = vmul.f32 %v480, %v928
    %v993 = vmul.f32 %v481, %v929
    %v994 = vmul.f32 %v482, %v930
    %v995 = vmul.f32 %v483, %v931
    %v996 = vmul.f32 %v484, %v932
    %v997 = vmul.f32 %v485, %v933
    %v998 = vmul.f32 %v486, %v934
    %v999 = vmul.f32 %v487, %v935
    %v1000 = vmul.f32 %v488, %v936
    %v1001 = vmul.f32 %v489, %v937
    %v1002 = vmul.f32 %v490, %v938
    %v1003 = vmul.f32 %v491, %v939
    %v1004 = vmul.f32 %v492, %v940
    %v1005 = vmul.f32 %v493, %v941
    %v1006 = vmul.f32 %v494, %v942
    %v1007 = vmul.f32 %v495, %v943
    %v1008 = vmul.f32 %v496, %v944
    %v1009 = vmul.f32 %v497, %v945
    %v1010 = vmul.f32 %v498, %v946
    %v1011 = vmul.f32 %v499, %v947
    %v1012 = vpack.c.bf16 %v950, %v948
    %v1013 = vpack.c.bf16 %v951, %v949
    %v1014 = vpack.c.bf16 %v954, %v952
    %v1015 = vpack.c.bf16 %v955, %v953
    %v1016 = vpack.c.bf16 %v958, %v956
    %v1017 = vpack.c.bf16 %v959, %v957
    %v1018 = vpack.c.bf16 %v962, %v960
    %v1019 = vpack.c.bf16 %v963, %v961
    %v1020 = vpack.c.bf16 %v966, %v964
    %v1021 = vpack.c.bf16 %v967, %v965
    %v1022 = vpack.c.bf16 %v970, %v968
    %v1023 = vpack.c.bf16 %v971, %v969
    %v1024 = vpack.c.bf16 %v974, %v972
    %v1025 = vpack.c.bf16 %v975, %v973
    %v1026 = vpack.c.bf16 %v978, %v976
    %v1027 = vpack.c.bf16 %v979, %v977
    %v1028 = vpack.c.bf16 %v982, %v980
    %v1029 = vpack.c.bf16 %v983, %v981
    %v1030 = vpack.c.bf16 %v986, %v984
    %v1031 = vpack.c.bf16 %v987, %v985
    %v1032 = vpack.c.bf16 %v990, %v988
    %v1033 = vpack.c.bf16 %v991, %v989
    %v1034 = vpack.c.bf16 %v994, %v992
    %v1035 = vpack.c.bf16 %v995, %v993
    %v1036 = vpack.c.bf16 %v998, %v996
    %v1037 = vpack.c.bf16 %v999, %v997
    %v1038 = vpack.c.bf16 %v1002, %v1000
    %v1039 = vpack.c.bf16 %v1003, %v1001
    %v1040 = vpack.c.bf16 %v1006, %v1004
    %v1041 = vpack.c.bf16 %v1007, %v1005
    %v1042 = vpack.c.bf16 %v1010, %v1008
    %v1043 = vpack.c.bf16 %v1011, %v1009
    %v1044 = vld [vmem:[%s3] sm:$0xf]
    %v1045 = vld [vmem:[%s3 + $0x4] sm:$0xf]
    %v1046 = vld [vmem:[%s3 + $0x8] sm:$0xf]
    %v1047 = vld [vmem:[%s3 + $0xc] sm:$0xf]
    %v1048 = vld [vmem:[%s3 + $0x10] sm:$0xf]
    %v1049 = vld [vmem:[%s3 + $0x14] sm:$0xf]
    %v1050 = vld [vmem:[%s3 + $0x18] sm:$0xf]
    %v1051 = vld [vmem:[%s3 + $0x1c] sm:$0xf]
    %v1052 = vld [vmem:[%s3 + $0x20] sm:$0xf]
    %v1053 = vld [vmem:[%s3 + $0x24] sm:$0xf]
    %v1054 = vld [vmem:[%s3 + $0x28] sm:$0xf]
    %v1055 = vld [vmem:[%s3 + $0x2c] sm:$0xf]
    %v1056 = vld [vmem:[%s3 + $0x30] sm:$0xf]
    %v1057 = vld [vmem:[%s3 + $0x34] sm:$0xf]
    %v1058 = vld [vmem:[%s3 + $0x38] sm:$0xf]
    %v1059 = vld [vmem:[%s3 + $0x3c] sm:$0xf]
    %v1060 = vld [vmem:[%s3 + $0x40] sm:$0xf]
    %v1061 = vld [vmem:[%s3 + $0x44] sm:$0xf]
    %v1062 = vld [vmem:[%s3 + $0x48] sm:$0xf]
    %v1063 = vld [vmem:[%s3 + $0x4c] sm:$0xf]
    %v1064 = vld [vmem:[%s3 + $0x50] sm:$0xf]
    %v1065 = vld [vmem:[%s3 + $0x54] sm:$0xf]
    %v1066 = vld [vmem:[%s3 + $0x58] sm:$0xf]
    %v1067 = vld [vmem:[%s3 + $0x5c] sm:$0xf]
    %v1068 = vld [vmem:[%s3 + $0x60] sm:$0xf]
    %v1069 = vld [vmem:[%s3 + $0x64] sm:$0xf]
    %v1070 = vld [vmem:[%s3 + $0x68] sm:$0xf]
    %v1071 = vld [vmem:[%s3 + $0x6c] sm:$0xf]
    %v1072 = vld [vmem:[%s3 + $0x70] sm:$0xf]
    %v1073 = vld [vmem:[%s3 + $0x74] sm:$0xf]
    %v1074 = vld [vmem:[%s3 + $0x78] sm:$0xf]
    %v1075 = vld [vmem:[%s3 + $0x7c] sm:$0xf]
    %v1076 = vld [vmem:[%s4] sm:$0x1]
    %v1078 = vlaneseq
    %v1079 = vshrl.u32 %v1078, 7
    %v1080 = vsub.s32 0, %v1079
    %v1081 = vrot.slane %v1076, %v1080
    %v1115 = vunpack.c.l.b16 %v1044
    %v1116 = vunpack.c.l.b16 %v1045
    %v1117 = vunpack.c.l.b16 %v1046
    %v1118 = vunpack.c.l.b16 %v1047
    %v1119 = vunpack.c.l.b16 %v1048
    %v1120 = vunpack.c.l.b16 %v1049
    %v1121 = vunpack.c.l.b16 %v1050
    %v1122 = vunpack.c.l.b16 %v1051
    %v1123 = vunpack.c.l.b16 %v1052
    %v1124 = vunpack.c.l.b16 %v1053
    %v1125 = vunpack.c.l.b16 %v1054
    %v1126 = vunpack.c.l.b16 %v1055
    %v1127 = vunpack.c.l.b16 %v1056
    %v1128 = vunpack.c.l.b16 %v1057
    %v1129 = vunpack.c.l.b16 %v1058
    %v1130 = vunpack.c.l.b16 %v1059
    %v1131 = vunpack.c.l.b16 %v1060
    %v1132 = vunpack.c.l.b16 %v1061
    %v1133 = vunpack.c.l.b16 %v1062
    %v1134 = vunpack.c.l.b16 %v1063
    %v1135 = vunpack.c.l.b16 %v1064
    %v1136 = vunpack.c.l.b16 %v1065
    %v1137 = vunpack.c.l.b16 %v1066
    %v1138 = vunpack.c.l.b16 %v1067
    %v1139 = vunpack.c.l.b16 %v1068
    %v1140 = vunpack.c.l.b16 %v1069
    %v1141 = vunpack.c.l.b16 %v1070
    %v1142 = vunpack.c.l.b16 %v1071
    %v1143 = vunpack.c.l.b16 %v1072
    %v1144 = vunpack.c.l.b16 %v1073
    %v1145 = vunpack.c.l.b16 %v1074
    %v1146 = vunpack.c.l.b16 %v1075
    %v1147 = vpack.c.b16 %v1116, %v1115
    %v1148 = vpack.c.b16 %v1118, %v1117
    %v1149 = vpack.c.b16 %v1120, %v1119
    %v1150 = vpack.c.b16 %v1122, %v1121
    %v1151 = vpack.c.b16 %v1124, %v1123
    %v1152 = vpack.c.b16 %v1126, %v1125
    %v1153 = vpack.c.b16 %v1128, %v1127
    %v1154 = vpack.c.b16 %v1130, %v1129
    %v1155 = vpack.c.b16 %v1132, %v1131
    %v1156 = vpack.c.b16 %v1134, %v1133
    %v1157 = vpack.c.b16 %v1136, %v1135
    %v1158 = vpack.c.b16 %v1138, %v1137
    %v1159 = vpack.c.b16 %v1140, %v1139
    %v1160 = vpack.c.b16 %v1142, %v1141
    %v1161 = vpack.c.b16 %v1144, %v1143
    %v1162 = vpack.c.b16 %v1146, %v1145
    %1179 = vmatprep.subr.bf16.mxu0 0
    %1180 = vmatpush1.bf16.msra.mxu0 %v1147
    %1181 = vmatprep.subr.bf16.mxu0 0
    %1182 = vmatpush1.bf16.msra.mxu0 %v1148
    %1183 = vmatprep.subr.bf16.mxu0 0
    %1184 = vmatpush1.bf16.msra.mxu0 %v1149
    %1185 = vmatprep.subr.bf16.mxu0 0
    %1186 = vmatpush1.bf16.msra.mxu0 %v1150
    %1187 = vmatprep.subr.bf16.mxu0 0
    %1188 = vmatpush1.bf16.msra.mxu0 %v1151
    %1189 = vmatprep.subr.bf16.mxu0 0
    %1190 = vmatpush1.bf16.msra.mxu0 %v1152
    %1191 = vmatprep.subr.bf16.mxu0 0
    %1192 = vmatpush1.bf16.msra.mxu0 %v1153
    %1193 = vmatprep.subr.bf16.mxu0 0
    %1194 = vmatpush1.bf16.msra.mxu0 %v1154
    %1195 = vmatprep.subr.bf16.mxu0 0
    %1196 = vmatpush1.bf16.msra.mxu0 %v1155
    %1197 = vmatprep.subr.bf16.mxu0 0
    %1198 = vmatpush1.bf16.msra.mxu0 %v1156
    %1199 = vmatprep.subr.bf16.mxu0 0
    %1200 = vmatpush1.bf16.msra.mxu0 %v1157
    %1201 = vmatprep.subr.bf16.mxu0 0
    %1202 = vmatpush1.bf16.msra.mxu0 %v1158
    %1203 = vmatprep.subr.bf16.mxu0 0
    %1204 = vmatpush1.bf16.msra.mxu0 %v1159
    %1205 = vmatprep.subr.bf16.mxu0 0
    %1206 = vmatpush1.bf16.msra.mxu0 %v1160
    %1207 = vmatprep.subr.bf16.mxu0 0
    %1208 = vmatpush1.bf16.msra.mxu0 %v1161
    %1209 = vmatprep.subr.bf16.mxu0 0
    %1210 = vmatpush1.bf16.msra.mxu0 %v1162
    %1211 = vmatprep.mubr.bf16.mxu0 %v1013
    %1212 = vmatmul.mubr.bf16.gmra.mrb[0].mxu0 %v1012
    %v1213 = vpop.f32.mrb[0].mxu0
    %v1214 = vadd.f32 %v1081, %v1213
    %v1215 = vpop.f32.mrb[0].mxu0
    %v1216 = vpop.f32.mrb[0].mxu0
    %v1217 = vadd.f32 %v1081, %v1216
    %v1218 = vpop.f32.mrb[0].mxu0
    %1219 = vmatprep.mubr.bf16.mxu0 %v1015
    %1220 = vmatmul.mubr.bf16.gmra.mrb[0].mxu0 %v1014
    %v1221 = vpop.f32.mrb[0].mxu0
    %v1222 = vadd.f32 %v1081, %v1221
    %v1223 = vpop.f32.mrb[0].mxu0
    %v1224 = vpop.f32.mrb[0].mxu0
    %v1225 = vadd.f32 %v1081, %v1224
    %v1226 = vpop.f32.mrb[0].mxu0
    %1227 = vmatprep.mubr.bf16.mxu0 %v1017
    %1228 = vmatmul.mubr.bf16.gmra.mrb[0].mxu0 %v1016
    %v1229 = vpop.f32.mrb[0].mxu0
    %v1230 = vadd.f32 %v1081, %v1229
    %v1231 = vpop.f32.mrb[0].mxu0
    %v1232 = vpop.f32.mrb[0].mxu0
    %v1233 = vadd.f32 %v1081, %v1232
    %v1234 = vpop.f32.mrb[0].mxu0
    %1235 = vmatprep.mubr.bf16.mxu0 %v1019
    %1236 = vmatmul.mubr.bf16.gmra.mrb[0].mxu0 %v1018
    %v1237 = vpop.f32.mrb[0].mxu0
    %v1238 = vadd.f32 %v1081, %v1237
    %v1239 = vpop.f32.mrb[0].mxu0
    %v1240 = vpop.f32.mrb[0].mxu0
    %v1241 = vadd.f32 %v1081, %v1240
    %v1242 = vpop.f32.mrb[0].mxu0
    %1243 = vmatprep.mubr.bf16.mxu0 %v1021
    %1244 = vmatmul.mubr.bf16.gmra.mrb[0].mxu0 %v1020
    %v1245 = vpop.f32.mrb[0].mxu0
    %v1246 = vadd.f32 %v1081, %v1245
    %v1247 = vpop.f32.mrb[0].mxu0
    %v1248 = vpop.f32.mrb[0].mxu0
    %v1249 = vadd.f32 %v1081, %v1248
    %v1250 = vpop.f32.mrb[0].mxu0
    %1251 = vmatprep.mubr.bf16.mxu0 %v1023
    %1252 = vmatmul.mubr.bf16.gmra.mrb[0].mxu0 %v1022
    %v1253 = vpop.f32.mrb[0].mxu0
    %v1254 = vadd.f32 %v1081, %v1253
    %v1255 = vpop.f32.mrb[0].mxu0
    %v1256 = vpop.f32.mrb[0].mxu0
    %v1257 = vadd.f32 %v1081, %v1256
    %v1258 = vpop.f32.mrb[0].mxu0
    %1259 = vmatprep.mubr.bf16.mxu0 %v1025
    %1260 = vmatmul.mubr.bf16.gmra.mrb[0].mxu0 %v1024
    %v1261 = vpop.f32.mrb[0].mxu0
    %v1262 = vadd.f32 %v1081, %v1261
    %v1263 = vpop.f32.mrb[0].mxu0
    %v1264 = vpop.f32.mrb[0].mxu0
    %v1265 = vadd.f32 %v1081, %v1264
    %v1266 = vpop.f32.mrb[0].mxu0
    %1267 = vmatprep.mubr.bf16.mxu0 %v1027
    %1268 = vmatmul.mubr.bf16.gmra.mrb[0].mxu0 %v1026
    %v1269 = vpop.f32.mrb[0].mxu0
    %v1270 = vadd.f32 %v1081, %v1269
    %v1271 = vpop.f32.mrb[0].mxu0
    %v1272 = vpop.f32.mrb[0].mxu0
    %v1273 = vadd.f32 %v1081, %v1272
    %v1274 = vpop.f32.mrb[0].mxu0
    %1275 = vmatprep.mubr.bf16.mxu0 %v1029
    %1276 = vmatmul.mubr.bf16.gmra.mrb[0].mxu0 %v1028
    %v1277 = vpop.f32.mrb[0].mxu0
    %v1278 = vadd.f32 %v1081, %v1277
    %v1279 = vpop.f32.mrb[0].mxu0
    %v1280 = vpop.f32.mrb[0].mxu0
    %v1281 = vadd.f32 %v1081, %v1280
    %v1282 = vpop.f32.mrb[0].mxu0
    %1283 = vmatprep.mubr.bf16.mxu0 %v1031
    %1284 = vmatmul.mubr.bf16.gmra.mrb[0].mxu0 %v1030
    %v1285 = vpop.f32.mrb[0].mxu0
    %v1286 = vadd.f32 %v1081, %v1285
    %v1287 = vpop.f32.mrb[0].mxu0
    %v1288 = vpop.f32.mrb[0].mxu0
    %v1289 = vadd.f32 %v1081, %v1288
    %v1290 = vpop.f32.mrb[0].mxu0
    %1291 = vmatprep.mubr.bf16.mxu0 %v1033
    %1292 = vmatmul.mubr.bf16.gmra.mrb[0].mxu0 %v1032
    %v1293 = vpop.f32.mrb[0].mxu0
    %v1294 = vadd.f32 %v1081, %v1293
    %v1295 = vpop.f32.mrb[0].mxu0
    %v1296 = vpop.f32.mrb[0].mxu0
    %v1297 = vadd.f32 %v1081, %v1296
    %v1298 = vpop.f32.mrb[0].mxu0
    %1299 = vmatprep.mubr.bf16.mxu0 %v1035
    %1300 = vmatmul.mubr.bf16.gmra.mrb[0].mxu0 %v1034
    %v1301 = vpop.f32.mrb[0].mxu0
    %v1302 = vadd.f32 %v1081, %v1301
    %v1303 = vpop.f32.mrb[0].mxu0
    %v1304 = vpop.f32.mrb[0].mxu0
    %v1305 = vadd.f32 %v1081, %v1304
    %v1306 = vpop.f32.mrb[0].mxu0
    %1307 = vmatprep.mubr.bf16.mxu0 %v1037
    %1308 = vmatmul.mubr.bf16.gmra.mrb[0].mxu0 %v1036
    %v1309 = vpop.f32.mrb[0].mxu0
    %v1310 = vadd.f32 %v1081, %v1309
    %v1311 = vpop.f32.mrb[0].mxu0
    %v1312 = vpop.f32.mrb[0].mxu0
    %v1313 = vadd.f32 %v1081, %v1312
    %v1314 = vpop.f32.mrb[0].mxu0
    %1315 = vmatprep.mubr.bf16.mxu0 %v1039
    %1316 = vmatmul.mubr.bf16.gmra.mrb[0].mxu0 %v1038
    %v1317 = vpop.f32.mrb[0].mxu0
    %v1318 = vadd.f32 %v1081, %v1317
    %v1319 = vpop.f32.mrb[0].mxu0
    %v1320 = vpop.f32.mrb[0].mxu0
    %v1321 = vadd.f32 %v1081, %v1320
    %v1322 = vpop.f32.mrb[0].mxu0
    %1323 = vmatprep.mubr.bf16.mxu0 %v1041
    %1324 = vmatmul.mubr.bf16.gmra.mrb[0].mxu0 %v1040
    %v1325 = vpop.f32.mrb[0].mxu0
    %v1326 = vadd.f32 %v1081, %v1325
    %v1327 = vpop.f32.mrb[0].mxu0
    %v1328 = vpop.f32.mrb[0].mxu0
    %v1329 = vadd.f32 %v1081, %v1328
    %v1330 = vpop.f32.mrb[0].mxu0
    %1331 = vmatprep.mubr.bf16.mxu0 %v1043
    %1332 = vmatmul.mubr.bf16.gmra.mrb[0].mxu0 %v1042
    %v1333 = vpop.f32.mrb[0].mxu0
    %v1334 = vadd.f32 %v1081, %v1333
    %v1335 = vpop.f32.mrb[0].mxu0
    %v1336 = vpop.f32.mrb[0].mxu0
    %v1337 = vadd.f32 %v1081, %v1336
    %v1338 = vpop.f32.mrb[0].mxu0
    %1339 = vdwg.mxu0
    %v1340 = vpack.c.bf16 %v1217, %v1214
    %v1341 = vpack.c.bf16 %v1225, %v1222
    %v1342 = vpack.c.bf16 %v1233, %v1230
    %v1343 = vpack.c.bf16 %v1241, %v1238
    %v1344 = vpack.c.bf16 %v1249, %v1246
    %v1345 = vpack.c.bf16 %v1257, %v1254
    %v1346 = vpack.c.bf16 %v1265, %v1262
    %v1347 = vpack.c.bf16 %v1273, %v1270
    %v1348 = vpack.c.bf16 %v1281, %v1278
    %v1349 = vpack.c.bf16 %v1289, %v1286
    %v1350 = vpack.c.bf16 %v1297, %v1294
    %v1351 = vpack.c.bf16 %v1305, %v1302
    %v1352 = vpack.c.bf16 %v1313, %v1310
    %v1353 = vpack.c.bf16 %v1321, %v1318
    %v1354 = vpack.c.bf16 %v1329, %v1326
    %v1355 = vpack.c.bf16 %v1337, %v1334
    %v1372 = vunpack.c.l.b16 %v1340
    %v1373 = vunpack.c.h.b16 %v1340
    %v1374 = vunpack.c.l.b16 %v1341
    %v1375 = vunpack.c.h.b16 %v1341
    %v1376 = vunpack.c.l.b16 %v1342
    %v1377 = vunpack.c.h.b16 %v1342
    %v1378 = vunpack.c.l.b16 %v1343
    %v1379 = vunpack.c.h.b16 %v1343
    %v1380 = vunpack.c.l.b16 %v1344
    %v1381 = vunpack.c.h.b16 %v1344
    %v1382 = vunpack.c.l.b16 %v1345
    %v1383 = vunpack.c.h.b16 %v1345
    %v1384 = vunpack.c.l.b16 %v1346
    %v1385 = vunpack.c.h.b16 %v1346
    %v1386 = vunpack.c.l.b16 %v1347
    %v1387 = vunpack.c.h.b16 %v1347
    %v1388 = vunpack.c.l.b16 %v1348
    %v1389 = vunpack.c.h.b16 %v1348
    %v1390 = vunpack.c.l.b16 %v1349
    %v1391 = vunpack.c.h.b16 %v1349
    %v1392 = vunpack.c.l.b16 %v1350
    %v1393 = vunpack.c.h.b16 %v1350
    %v1394 = vunpack.c.l.b16 %v1351
    %v1395 = vunpack.c.h.b16 %v1351
    %v1396 = vunpack.c.l.b16 %v1352
    %v1397 = vunpack.c.h.b16 %v1352
    %v1398 = vunpack.c.l.b16 %v1353
    %v1399 = vunpack.c.h.b16 %v1353
    %v1400 = vunpack.c.l.b16 %v1354
    %v1401 = vunpack.c.h.b16 %v1354
    %v1402 = vunpack.c.l.b16 %v1355
    %v1403 = vunpack.c.h.b16 %v1355
    %v1404 = vpack.c.b16 %v1372, %v1372
    %v1405 = vpack.c.b16 %v1373, %v1373
    %v1406 = vpack.c.b16 %v1374, %v1374
    %v1407 = vpack.c.b16 %v1375, %v1375
    %v1408 = vpack.c.b16 %v1376, %v1376
    %v1409 = vpack.c.b16 %v1377, %v1377
    %v1410 = vpack.c.b16 %v1378, %v1378
    %v1411 = vpack.c.b16 %v1379, %v1379
    %v1412 = vpack.c.b16 %v1380, %v1380
    %v1413 = vpack.c.b16 %v1381, %v1381
    %v1414 = vpack.c.b16 %v1382, %v1382
    %v1415 = vpack.c.b16 %v1383, %v1383
    %v1416 = vpack.c.b16 %v1384, %v1384
    %v1417 = vpack.c.b16 %v1385, %v1385
    %v1418 = vpack.c.b16 %v1386, %v1386
    %v1419 = vpack.c.b16 %v1387, %v1387
    %v1420 = vpack.c.b16 %v1388, %v1388
    %v1421 = vpack.c.b16 %v1389, %v1389
    %v1422 = vpack.c.b16 %v1390, %v1390
    %v1423 = vpack.c.b16 %v1391, %v1391
    %v1424 = vpack.c.b16 %v1392, %v1392
    %v1425 = vpack.c.b16 %v1393, %v1393
    %v1426 = vpack.c.b16 %v1394, %v1394
    %v1427 = vpack.c.b16 %v1395, %v1395
    %v1428 = vpack.c.b16 %v1396, %v1396
    %v1429 = vpack.c.b16 %v1397, %v1397
    %v1430 = vpack.c.b16 %v1398, %v1398
    %v1431 = vpack.c.b16 %v1399, %v1399
    %v1432 = vpack.c.b16 %v1400, %v1400
    %v1433 = vpack.c.b16 %v1401, %v1401
    %v1434 = vpack.c.b16 %v1402, %v1402
    %v1435 = vpack.c.b16 %v1403, %v1403
    %1468 = vst [vmem:[#allocation2] sm:$0xf] %v1404
    %1469 = vst [vmem:[#allocation2 + $0x4] sm:$0xf] %v1405
    %1470 = vst [vmem:[#allocation2 + $0x8] sm:$0xf] %v1406
    %1471 = vst [vmem:[#allocation2 + $0xc] sm:$0xf] %v1407
    %1472 = vst [vmem:[#allocation2 + $0x10] sm:$0xf] %v1408
    %1473 = vst [vmem:[#allocation2 + $0x14] sm:$0xf] %v1409
    %1474 = vst [vmem:[#allocation2 + $0x18] sm:$0xf] %v1410
    %1475 = vst [vmem:[#allocation2 + $0x1c] sm:$0xf] %v1411
    %1476 = vst [vmem:[#allocation2 + $0x20] sm:$0xf] %v1412
    %1477 = vst [vmem:[#allocation2 + $0x24] sm:$0xf] %v1413
    %1478 = vst [vmem:[#allocation2 + $0x28] sm:$0xf] %v1414
    %1479 = vst [vmem:[#allocation2 + $0x2c] sm:$0xf] %v1415
    %1480 = vst [vmem:[#allocation2 + $0x30] sm:$0xf] %v1416
    %1481 = vst [vmem:[#allocation2 + $0x34] sm:$0xf] %v1417
    %1482 = vst [vmem:[#allocation2 + $0x38] sm:$0xf] %v1418
    %1483 = vst [vmem:[#allocation2 + $0x3c] sm:$0xf] %v1419
    %1484 = vst [vmem:[#allocation2 + $0x40] sm:$0xf] %v1420
    %1485 = vst [vmem:[#allocation2 + $0x44] sm:$0xf] %v1421
    %1486 = vst [vmem:[#allocation2 + $0x48] sm:$0xf] %v1422
    %1487 = vst [vmem:[#allocation2 + $0x4c] sm:$0xf] %v1423
    %1488 = vst [vmem:[#allocation2 + $0x50] sm:$0xf] %v1424
    %1489 = vst [vmem:[#allocation2 + $0x54] sm:$0xf] %v1425
    %1490 = vst [vmem:[#allocation2 + $0x58] sm:$0xf] %v1426
    %1491 = vst [vmem:[#allocation2 + $0x5c] sm:$0xf] %v1427
    %1492 = vst [vmem:[#allocation2 + $0x60] sm:$0xf] %v1428
    %1493 = vst [vmem:[#allocation2 + $0x64] sm:$0xf] %v1429
    %1494 = vst [vmem:[#allocation2 + $0x68] sm:$0xf] %v1430
    %1495 = vst [vmem:[#allocation2 + $0x6c] sm:$0xf] %v1431
    %1496 = vst [vmem:[#allocation2 + $0x70] sm:$0xf] %v1432
    %1497 = vst [vmem:[#allocation2 + $0x74] sm:$0xf] %v1433
    %1498 = vst [vmem:[#allocation2 + $0x78] sm:$0xf] %v1434
    %1499 = vst [vmem:[#allocation2 + $0x7c] sm:$0xf] %v1435
    // Predicated region
    $region22: #{tpu_custom_call.1} parent=1 // pred_check
      _
    $region23: #{tpu_custom_call.1} parent=1 // pred_check_branch
      %1501 = sbr.rel (0) target = $region25
    $region24: #{tpu_custom_call.1} parent=1 // pred_region
      %s1503 = ssub.s32 2048, 2048
      %1504 = vsyncadd [#allocation3], %s1503
      %s1505 = sshll.u32 [#allocation2], 4
      %s1506 = int_to_ptr.vmem [resolvable:$true] %s1505
      %1511 = dma.vmem_to_hbm [thread:$0]  %s1506, 2048, %s5, [#allocation3], 64, 64, 4
    $region25: #{tpu_custom_call.1} parent=1 // pred_fallthru
      _
    // Predicated region
    $region26: #{tpu_custom_call.1} parent=1 // pred_check
      _
    $region27: #{tpu_custom_call.1} parent=1 // pred_check_branch
      %1513 = sbr.rel (0) target = $region29
    $region28: #{tpu_custom_call.1} parent=1 // pred_region
      %1514 = dma.done [#allocation3], 2048
    $region29: #{tpu_custom_call.1} parent=1 // pred_fallthru
      _
    %1515 = vsyncpa [#allocation3], 1

</llo_original>
